<compile_context>
chip_gen: v5e
topology: v5e:2x2
jax: 0.10.0
libtpu: 0.0.40
codegen_flags: <defaults>
</compile_context>

<pallas_src>
import functools
import math

import jax
import jax.numpy as jnp
from jax.experimental import pallas as pl
from jax.experimental.pallas import tpu as pltpu


_VMEM_LIMIT_BYTES = 32 * 1024 * 1024   # comfortably fits every TPU generation


def _round_up(x, m):
    return ((x + m - 1) // m) * m


def _choose_tm(m0):
    """Row-tile size: one block for small problems, 512-row tiles for large.

    512 is a multiple of both 8 (sublanes) and 128 (lanes), reaches ~85% of the
    HBM roofline in measured mem-bound kernels, and keeps >= 2 grid steps for
    M > 1024 so v7x's two TensorCores both get work.
    """
    if m0 <= 1024:
        return _round_up(m0, 8)
    return 512


def _compiler_params():
    return pltpu.CompilerParams(
        dimension_semantics=("parallel",),
        vmem_limit_bytes=_VMEM_LIMIT_BYTES,
    )


# ----------------------------------------------------------------------------
# Pallas kernels
# ----------------------------------------------------------------------------
def _matmul_bias_kernel(a_ref, w_ref, b_ref, o_ref, *, apply_relu):
    """o = relu?(a @ w + b).  a:(TM,K) bf16, w:(K,N) bf16, b:(1,N) f32."""
    acc = jnp.dot(a_ref[...], w_ref[...], preferred_element_type=jnp.float32)
    acc = acc + b_ref[...]                      # f32 epilogue (v5e VPU has no bf16)
    if apply_relu:
        acc = jnp.maximum(acc, 0.0)
    o_ref[...] = acc.astype(o_ref.dtype)


def pallas_matmul_bias(a, w, b, *, apply_relu, out_dtype):
    """Row-tiled matmul+bias(+ReLU).  a:(M,K) bf16, w:(K,N) bf16, b:(N,) f32."""
    M0, K = a.shape
    K2, N = w.shape
    assert K == K2
    tm = _choose_tm(M0)
    num_tiles = pl.cdiv(M0, tm)                 # ragged last block handled by Pallas
    Mp = num_tiles * tm
    b2 = b.reshape(1, N).astype(jnp.float32)
    out = pl.pallas_call(
        functools.partial(_matmul_bias_kernel, apply_relu=apply_relu),
        out_shape=jax.ShapeDtypeStruct((Mp, N), out_dtype),
        grid=(num_tiles,),
        in_specs=[
            pl.BlockSpec((tm, K), lambda i: (i, 0)),
            pl.BlockSpec((K, N), lambda i: (0, 0)),     # weights resident
            pl.BlockSpec((1, N), lambda i: (0, 0)),     # bias resident
        ],
        out_specs=pl.BlockSpec((tm, N), lambda i: (i, 0)),
        compiler_params=_compiler_params(),
    )(a, w, b2)
    return out if Mp == M0 else out[:M0]


def _conv_vq_kernel(p_ref, w_ref, b_ref, cbt_ref, cb_ref, cbsq_ref, idx_ref, zq_ref):
    """Fused final-conv + vector quantization on one M tile.

    p:(TM,K) bf16 patches, w:(K,D) bf16, b:(1,D) f32,
    cbt:(D,Ncode) f32 (lane-dense codebook.T), cb:(Ncode,D) f32, cbsq:(1,Ncode) f32.
    Outputs: idx:(TM,1) int32, zq:(TM,D) f32.
    """
    z = jnp.dot(p_ref[...], w_ref[...], preferred_element_type=jnp.float32)
    z = z + b_ref[...]                                               # (TM, D) f32

    # argmin_c ||z - c||^2 == argmin_c (||c||^2 - 2 z.c): the per-row ||z||^2
    # constant is dropped (saves a VPU multiply + XLU row-reduce per tile).
    cross = jnp.dot(z, cbt_ref[...], preferred_element_type=jnp.float32)  # (TM, Ncode)
    d = cbsq_ref[...] - 2.0 * cross                                  # f32 "distances"

    ncode = d.shape[1]
    d_min = jnp.min(d, axis=1, keepdims=True)
    lane = jax.lax.broadcasted_iota(jnp.int32, d.shape, 1)
    # first-occurrence argmin: min lane index among positions hitting the min
    idx = jnp.min(jnp.where(d == d_min, lane, ncode), axis=1)        # (TM,) int32
    idx_ref[...] = idx[:, None]                                      # (TM, 1) store

    one_hot = (lane == idx[:, None]).astype(jnp.float32)             # (TM, Ncode)
    zq_ref[...] = jnp.dot(one_hot, cb_ref[...], preferred_element_type=jnp.float32)


def pallas_conv4_vq(patches, w4_2d, b4, codebook):
    """patches:(M,K) bf16, w4_2d:(K,D) bf16, b4:(D,), codebook:(Ncode,D)."""
    M0, K = patches.shape
    ncode, D = codebook.shape
    tm = _choose_tm(M0)
    num_tiles = pl.cdiv(M0, tm)
    Mp = num_tiles * tm

    cb = codebook.astype(jnp.float32)
    cbt = cb.T                                     # (D, Ncode): lane-dense MXU RHS
    cbsq = jnp.sum(cb * cb, axis=1)[None, :]       # (1, Ncode)
    b2 = b4.reshape(1, D).astype(jnp.float32)

    idx2d, zq = pl.pallas_call(
        _conv_vq_kernel,
        out_shape=(
            jax.ShapeDtypeStruct((Mp, 1), jnp.int32),
            jax.ShapeDtypeStruct((Mp, D), jnp.float32),
        ),
        grid=(num_tiles,),
        in_specs=[
            pl.BlockSpec((tm, K), lambda i: (i, 0)),
            pl.BlockSpec((K, D), lambda i: (0, 0)),       # conv4 weights resident
            pl.BlockSpec((1, D), lambda i: (0, 0)),
            pl.BlockSpec((D, ncode), lambda i: (0, 0)),   # codebook.T resident
            pl.BlockSpec((ncode, D), lambda i: (0, 0)),   # codebook resident
            pl.BlockSpec((1, ncode), lambda i: (0, 0)),
        ],
        out_specs=(
            pl.BlockSpec((tm, 1), lambda i: (i, 0)),
            pl.BlockSpec((tm, D), lambda i: (i, 0)),
        ),
        compiler_params=_compiler_params(),
    )(patches, w4_2d, b2, cbt, cb, cbsq)

    indices = idx2d.reshape(-1)[:M0]
    return indices, zq[:M0]


# ----------------------------------------------------------------------------
# Glue: im2col (NHWC) + conv wrapper
# ----------------------------------------------------------------------------
def im2col(x, k, stride, pad):
    """x:(N,H,W,C) -> patches:(N*Ho*Wo, k*k*C); column order (kh, kw, cin)."""
    N, H, W, C = x.shape
    xp = jnp.pad(x, ((0, 0), (pad, pad), (pad, pad), (0, 0)))
    Ho = (H + 2 * pad - k) // stride + 1
    Wo = (W + 2 * pad - k) // stride + 1
    cols = []
    for i in range(k):
        for j in range(k):
            cols.append(xp[:, i:i + stride * Ho:stride, j:j + stride * Wo:stride, :])
    patches = jnp.concatenate(cols, axis=-1)          # (N, Ho, Wo, k*k*C)
    return patches.reshape(N * Ho * Wo, k * k * C), (N, Ho, Wo)


def conv2d_pallas(x_nhwc, w, b, *, stride, pad, apply_relu, out_dtype):
    """w:(kh,kw,Cin,Cout) laid out to match the im2col column ordering."""
    k = w.shape[0]
    patches, (N, Ho, Wo) = im2col(x_nhwc.astype(jnp.bfloat16), k, stride, pad)
    w2 = w.reshape(k * k * w.shape[2], w.shape[3]).astype(jnp.bfloat16)
    out = pallas_matmul_bias(patches, w2, b, apply_relu=apply_relu, out_dtype=out_dtype)
    return out.reshape(N, Ho, Wo, w.shape[3])


# ----------------------------------------------------------------------------
# Model
# ----------------------------------------------------------------------------
def init_params(key, in_channels, hidden_dim, num_embeddings, embedding_dim):
    ks = jax.random.split(key, 9)

    def conv_init(kw_key, kb_key, ksz, cin, cout):
        fan_in = cin * ksz * ksz
        bound = 1.0 / math.sqrt(fan_in)
        w = jax.random.uniform(kw_key, (ksz, ksz, cin, cout), jnp.float32, -bound, bound)
        b = jax.random.uniform(kb_key, (cout,), jnp.float32, -bound, bound)
        return w, b

    w1, b1 = conv_init(ks[0], ks[1], 4, in_channels, hidden_dim)
    w2, b2 = conv_init(ks[2], ks[3], 4, hidden_dim, hidden_dim)
    w3, b3 = conv_init(ks[4], ks[5], 4, hidden_dim, hidden_dim)
    w4, b4 = conv_init(ks[6], ks[7], 3, hidden_dim, embedding_dim)
    codebook = jax.random.normal(ks[8], (num_embeddings, embedding_dim), jnp.float32)
    return dict(w1=w1, b1=b1, w2=w2, b2=b2, w3=w3, b3=b3, w4=w4, b4=b4,
                codebook=codebook)


def vqvae_encoder_forward(x_nchw, params):
    # NCHW (PyTorch) -> NHWC (kernel layout)
    x = jnp.transpose(x_nchw, (0, 2, 3, 1))
    h = conv2d_pallas(x, params["w1"], params["b1"], stride=2, pad=1,
                      apply_relu=True, out_dtype=jnp.bfloat16)
    h = conv2d_pallas(h, params["w2"], params["b2"], stride=2, pad=1,
                      apply_relu=True, out_dtype=jnp.bfloat16)
    h = conv2d_pallas(h, params["w3"], params["b3"], stride=2, pad=1,
                      apply_relu=True, out_dtype=jnp.bfloat16)

    # conv4 + vector quantization fused into one Pallas kernel (z never hits HBM).
    w4 = params["w4"]
    k4 = w4.shape[0]
    patches4, (N, Ho, Wo) = im2col(h.astype(jnp.bfloat16), k4, 1, 1)
    w4_2d = w4.reshape(k4 * k4 * w4.shape[2], w4.shape[3]).astype(jnp.bfloat16)
    idx_flat, zq_flat = pallas_conv4_vq(patches4, w4_2d, params["b4"], params["codebook"])

    D = params["codebook"].shape[1]
    indices = idx_flat.reshape(N, Ho, Wo)
    z_q = zq_flat.reshape(N, Ho, Wo, D)
    return indices, z_q


# ----------------------------------------------------------------------------
# Pure-JAX reference (mirrors the kernel's bf16 MXU operand quantization,
# f32 accumulation / epilogues, f32 distance + argmin)
# ----------------------------------------------------------------------------
def reference_forward(x_nchw, params):
    def conv(x, w, b, stride, pad, relu):
        k = w.shape[0]
        patches, (N, Ho, Wo) = im2col(x.astype(jnp.bfloat16), k, stride, pad)
        w2 = w.reshape(k * k * w.shape[2], w.shape[3]).astype(jnp.bfloat16)
        out = jnp.dot(patches, w2, preferred_element_type=jnp.float32) + b[None, :]
        if relu:
            out = jnp.maximum(out, 0.0)
        return out.reshape(N, Ho, Wo, w.shape[3])

    x = jnp.transpose(x_nchw, (0, 2, 3, 1))
    h = conv(x, params["w1"], params["b1"], 2, 1, True).astype(jnp.bfloat16)
    h = conv(h, params["w2"], params["b2"], 2, 1, True).astype(jnp.bfloat16)
    h = conv(h, params["w3"], params["b3"], 2, 1, True).astype(jnp.bfloat16)
    z = conv(h, params["w4"], params["b4"], 1, 1, False)             # f32
    N, Ho, Wo, D = z.shape
    zf = z.reshape(-1, D)
    cb = params["codebook"].astype(jnp.float32)
    d = (jnp.sum(zf ** 2, axis=1, keepdims=True) + jnp.sum(cb ** 2, axis=1)[None, :]
         - 2.0 * zf @ cb.T)
    idx = jnp.argmin(d, axis=1).astype(jnp.int32)
    zq = cb[idx].reshape(N, Ho, Wo, D)
    return idx.reshape(N, Ho, Wo), zq, d


# ----------------------------------------------------------------------------
if __name__ == "__main__":
    key = jax.random.PRNGKey(0)
    B, C, H, W = 2, 4, 16, 16
    hidden_dim, num_embeddings, embedding_dim = 32, 512, 32

    kx, kp = jax.random.split(key)
    x = jax.random.normal(kx, (B, C, H, W), jnp.float32)
    params = init_params(kp, C, hidden_dim, num_embeddings, embedding_dim)

    fwd = jax.jit(vqvae_encoder_forward)
    indices, z_q = fwd(x, params)
    jax.block_until_ready((indices, z_q))

    assert indices.shape == (B, H // 8, W // 8), indices.shape
    assert z_q.shape == (B, H // 8, W // 8, embedding_dim), z_q.shape
    assert indices.dtype == jnp.int32, indices.dtype

    ref_idx, ref_zq, d_ref = reference_forward(x, params)

    flat_idx = indices.reshape(-1)
    flat_ref = ref_idx.reshape(-1)
    exact = flat_idx == flat_ref
    if not bool(jnp.all(exact)):
        # Tolerate mismatches only at numerical near-ties (MXU vs XLA f32
        # accumulation order); the kernel's chosen code must still be (near-)optimal.
        picked = jnp.take_along_axis(d_ref, flat_idx[:, None].astype(jnp.int32), axis=1)[:, 0]
        best = jnp.min(d_ref, axis=1)
        assert bool(jnp.all(exact | (picked <= best + 1e-3))), "index mismatch vs reference"

    cb = params["codebook"]
    zq_flat = z_q.reshape(-1, embedding_dim)
    assert bool(jnp.allclose(zq_flat, cb[flat_idx], atol=1e-5)), \
        "z_q is not the codebook row selected by the returned indices"
    m = exact[:, None]
    assert bool(jnp.allclose(jnp.where(m, zq_flat, 0.0),
                             jnp.where(m, ref_zq.reshape(-1, embedding_dim), 0.0),
                             rtol=1e-2, atol=1e-2)), "z_q mismatch vs reference"

    print("KERNEL_OK")
</pallas_src>

<mosaic_0001>
module attributes {stable_mosaic.version = 11 : i64} {
  func.func @_matmul_bias_kernel(%arg0: i32, %arg1: memref<128x64xbf16, #tpu.memory_space<vmem>>, %arg2: memref<64x32xbf16, #tpu.memory_space<vmem>>, %arg3: memref<1x32xf32, #tpu.memory_space<vmem>>, %arg4: memref<128x32xbf16, #tpu.memory_space<vmem>>) attributes {dimension_semantics = [#tpu.dimension_semantics<parallel>], iteration_bounds = array<i64: 1>, scalar_prefetch = 0 : i64, scratch_operands = 0 : i64, tpu.core_type = #tpu.core_type<tc>, window_params = [{transform_indices = @transform_0, window_bounds = array<i64: 128, 64>}, {pipeline_mode = #tpu.pipeline_mode<synchronous>, transform_indices = @transform_1, window_bounds = array<i64: 64, 32>}, {pipeline_mode = #tpu.pipeline_mode<synchronous>, transform_indices = @transform_2, window_bounds = array<i64: 1, 32>}, {transform_indices = @transform_3, window_bounds = array<i64: 128, 32>}]} {
    %c0 = arith.constant 0 : index
    %c0_0 = arith.constant 0 : index
    %0 = vector.load %arg1[%c0, %c0_0] : memref<128x64xbf16, #tpu.memory_space<vmem>>, vector<128x64xbf16>
    %c0_1 = arith.constant 0 : index
    %c0_2 = arith.constant 0 : index
    %1 = vector.load %arg2[%c0_1, %c0_2] : memref<64x32xbf16, #tpu.memory_space<vmem>>, vector<64x32xbf16>
    %cst = arith.constant dense<0.000000e+00> : vector<128x32xf32>
    %2 = tpu.matmul %0, %1, %cst {dimension_numbers = #tpu.dot_dimension_numbers<[1], [0], [0], [1], [0, 0, 1, 1], [], []>} : vector<128x64xbf16>, vector<64x32xbf16>, vector<128x32xf32> -> vector<128x32xf32>
    %c0_3 = arith.constant 0 : index
    %c0_4 = arith.constant 0 : index
    %3 = vector.load %arg3[%c0_3, %c0_4] : memref<1x32xf32, #tpu.memory_space<vmem>>, vector<1x32xf32>
    %4 = vector.broadcast %3 : vector<1x32xf32> to vector<128x32xf32>
    %5 = arith.addf %2, %4 : vector<128x32xf32>
    %cst_5 = arith.constant 0.000000e+00 : f32
    %6 = vector.broadcast %cst_5 : f32 to vector<128x32xf32>
    %7 = arith.maximumf %5, %6 : vector<128x32xf32>
    %8 = arith.truncf %7 : vector<128x32xf32> to vector<128x32xbf16>
    %c0_6 = arith.constant 0 : index
    %c0_7 = arith.constant 0 : index
    %9 = vector.load %arg4[%c0_6, %c0_7] : memref<128x32xbf16, #tpu.memory_space<vmem>>, vector<128x32xbf16>
    tpu.vector_store %arg4[%c0_6, %c0_7], %8 {strides = array<i32>} : memref<128x32xbf16, #tpu.memory_space<vmem>>, vector<128x32xbf16>,
    return
  }
  func.func @transform_0(%arg0: i32) -> (i32, i32) {
    %c0_i32 = arith.constant 0 : i32
    %c0_i32_0 = arith.constant 0 : i32
    return %arg0, %c0_i32 : i32, i32
  }
  func.func @transform_1(%arg0: i32) -> (i32, i32) {
    %c0_i32 = arith.constant 0 : i32
    %c0_i32_0 = arith.constant 0 : i32
    %c0_i32_1 = arith.constant 0 : i32
    return %c0_i32, %c0_i32_0 : i32, i32
  }
  func.func @transform_2(%arg0: i32) -> (i32, i32) {
    %c0_i32 = arith.constant 0 : i32
    %c0_i32_0 = arith.constant 0 : i32
    %c0_i32_1 = arith.constant 0 : i32
    return %c0_i32, %c0_i32_0 : i32, i32
  }
  func.func @transform_3(%arg0: i32) -> (i32, i32) {
    %c0_i32 = arith.constant 0 : i32
    %c0_i32_0 = arith.constant 0 : i32
    return %arg0, %c0_i32 : i32, i32
  }
}

module attributes {stable_mosaic.version = 11 : i64} {
  func.func @_matmul_bias_kernel(%arg0: i32, %arg1: memref<32x512xbf16, #tpu.memory_space<vmem>>, %arg2: memref<512x32xbf16, #tpu.memory_space<vmem>>, %arg3: memref<1x32xf32, #tpu.memory_space<vmem>>, %arg4: memref<32x32xbf16, #tpu.memory_space<vmem>>) attributes {dimension_semantics = [#tpu.dimension_semantics<parallel>], iteration_bounds = array<i64: 1>, scalar_prefetch = 0 : i64, scratch_operands = 0 : i64, tpu.core_type = #tpu.core_type<tc>, window_params = [{transform_indices = @transform_0, window_bounds = array<i64: 32, 512>}, {pipeline_mode = #tpu.pipeline_mode<synchronous>, transform_indices = @transform_1, window_bounds = array<i64: 512, 32>}, {pipeline_mode = #tpu.pipeline_mode<synchronous>, transform_indices = @transform_2, window_bounds = array<i64: 1, 32>}, {transform_indices = @transform_3, window_bounds = array<i64: 32, 32>}]} {
    %c0 = arith.constant 0 : index
    %c0_0 = arith.constant 0 : index
    %0 = vector.load %arg1[%c0, %c0_0] : memref<32x512xbf16, #tpu.memory_space<vmem>>, vector<32x512xbf16>
    %c0_1 = arith.constant 0 : index
    %c0_2 = arith.constant 0 : index
    %1 = vector.load %arg2[%c0_1, %c0_2] : memref<512x32xbf16, #tpu.memory_space<vmem>>, vector<512x32xbf16>
    %cst = arith.constant dense<0.000000e+00> : vector<32x32xf32>
    %2 = tpu.matmul %0, %1, %cst {dimension_numbers = #tpu.dot_dimension_numbers<[1], [0], [0], [1], [0, 0, 1, 1], [], []>} : vector<32x512xbf16>, vector<512x32xbf16>, vector<32x32xf32> -> vector<32x32xf32>
    %c0_3 = arith.constant 0 : index
    %c0_4 = arith.constant 0 : index
    %3 = vector.load %arg3[%c0_3, %c0_4] : memref<1x32xf32, #tpu.memory_space<vmem>>, vector<1x32xf32>
    %4 = vector.broadcast %3 : vector<1x32xf32> to vector<32x32xf32>
    %5 = arith.addf %2, %4 : vector<32x32xf32>
    %cst_5 = arith.constant 0.000000e+00 : f32
    %6 = vector.broadcast %cst_5 : f32 to vector<32x32xf32>
    %7 = arith.maximumf %5, %6 : vector<32x32xf32>
    %8 = arith.truncf %7 : vector<32x32xf32> to vector<32x32xbf16>
    %c0_6 = arith.constant 0 : index
    %c0_7 = arith.constant 0 : index
    %9 = vector.load %arg4[%c0_6, %c0_7] : memref<32x32xbf16, #tpu.memory_space<vmem>>, vector<32x32xbf16>
    tpu.vector_store %arg4[%c0_6, %c0_7], %8 {strides = array<i32>} : memref<32x32xbf16, #tpu.memory_space<vmem>>, vector<32x32xbf16>,
    return
  }
  func.func @transform_0(%arg0: i32) -> (i32, i32) {
    %c0_i32 = arith.constant 0 : i32
    %c0_i32_0 = arith.constant 0 : i32
    return %arg0, %c0_i32 : i32, i32
  }
  func.func @transform_1(%arg0: i32) -> (i32, i32) {
    %c0_i32 = arith.constant 0 : i32
    %c0_i32_0 = arith.constant 0 : i32
    %c0_i32_1 = arith.constant 0 : i32
    return %c0_i32, %c0_i32_0 : i32, i32
  }
  func.func @transform_2(%arg0: i32) -> (i32, i32) {
    %c0_i32 = arith.constant 0 : i32
    %c0_i32_0 = arith.constant 0 : i32
    %c0_i32_1 = arith.constant 0 : i32
    return %c0_i32, %c0_i32_0 : i32, i32
  }
  func.func @transform_3(%arg0: i32) -> (i32, i32) {
    %c0_i32 = arith.constant 0 : i32
    %c0_i32_0 = arith.constant 0 : i32
    return %arg0, %c0_i32 : i32, i32
  }
}

module attributes {stable_mosaic.version = 11 : i64} {
  func.func @_matmul_bias_kernel(%arg0: i32, %arg1: memref<8x512xbf16, #tpu.memory_space<vmem>>, %arg2: memref<512x32xbf16, #tpu.memory_space<vmem>>, %arg3: memref<1x32xf32, #tpu.memory_space<vmem>>, %arg4: memref<8x32xbf16, #tpu.memory_space<vmem>>) attributes {dimension_semantics = [#tpu.dimension_semantics<parallel>], iteration_bounds = array<i64: 1>, scalar_prefetch = 0 : i64, scratch_operands = 0 : i64, tpu.core_type = #tpu.core_type<tc>, window_params = [{transform_indices = @transform_0, window_bounds = array<i64: 8, 512>}, {pipeline_mode = #tpu.pipeline_mode<synchronous>, transform_indices = @transform_1, window_bounds = array<i64: 512, 32>}, {pipeline_mode = #tpu.pipeline_mode<synchronous>, transform_indices = @transform_2, window_bounds = array<i64: 1, 32>}, {transform_indices = @transform_3, window_bounds = array<i64: 8, 32>}]} {
    %c0 = arith.constant 0 : index
    %c0_0 = arith.constant 0 : index
    %0 = vector.load %arg1[%c0, %c0_0] : memref<8x512xbf16, #tpu.memory_space<vmem>>, vector<8x512xbf16>
    %c0_1 = arith.constant 0 : index
    %c0_2 = arith.constant 0 : index
    %1 = vector.load %arg2[%c0_1, %c0_2] : memref<512x32xbf16, #tpu.memory_space<vmem>>, vector<512x32xbf16>
    %cst = arith.constant dense<0.000000e+00> : vector<8x32xf32>
    %2 = tpu.matmul %0, %1, %cst {dimension_numbers = #tpu.dot_dimension_numbers<[1], [0], [0], [1], [0, 0, 1, 1], [], []>} : vector<8x512xbf16>, vector<512x32xbf16>, vector<8x32xf32> -> vector<8x32xf32>
    %c0_3 = arith.constant 0 : index
    %c0_4 = arith.constant 0 : index
    %3 = vector.load %arg3[%c0_3, %c0_4] : memref<1x32xf32, #tpu.memory_space<vmem>>, vector<1x32xf32>
    %4 = vector.broadcast %3 : vector<1x32xf32> to vector<8x32xf32>
    %5 = arith.addf %2, %4 : vector<8x32xf32>
    %cst_5 = arith.constant 0.000000e+00 : f32
    %6 = vector.broadcast %cst_5 : f32 to vector<8x32xf32>
    %7 = arith.maximumf %5, %6 : vector<8x32xf32>
    %8 = arith.truncf %7 : vector<8x32xf32> to vector<8x32xbf16>
    %c0_6 = arith.constant 0 : index
    %c0_7 = arith.constant 0 : index
    %9 = vector.load %arg4[%c0_6, %c0_7] : memref<8x32xbf16, #tpu.memory_space<vmem>>, vector<8x32xbf16>
    tpu.vector_store %arg4[%c0_6, %c0_7], %8 {strides = array<i32>} : memref<8x32xbf16, #tpu.memory_space<vmem>>, vector<8x32xbf16>,
    return
  }
  func.func @transform_0(%arg0: i32) -> (i32, i32) {
    %c0_i32 = arith.constant 0 : i32
    %c0_i32_0 = arith.constant 0 : i32
    return %arg0, %c0_i32 : i32, i32
  }
  func.func @transform_1(%arg0: i32) -> (i32, i32) {
    %c0_i32 = arith.constant 0 : i32
    %c0_i32_0 = arith.constant 0 : i32
    %c0_i32_1 = arith.constant 0 : i32
    return %c0_i32, %c0_i32_0 : i32, i32
  }
  func.func @transform_2(%arg0: i32) -> (i32, i32) {
    %c0_i32 = arith.constant 0 : i32
    %c0_i32_0 = arith.constant 0 : i32
    %c0_i32_1 = arith.constant 0 : i32
    return %c0_i32, %c0_i32_0 : i32, i32
  }
  func.func @transform_3(%arg0: i32) -> (i32, i32) {
    %c0_i32 = arith.constant 0 : i32
    %c0_i32_0 = arith.constant 0 : i32
    return %arg0, %c0_i32 : i32, i32
  }
}

module attributes {stable_mosaic.version = 11 : i64} {
  func.func @_conv_vq_kernel(%arg0: i32, %arg1: memref<8x288xbf16, #tpu.memory_space<vmem>>, %arg2: memref<288x32xbf16, #tpu.memory_space<vmem>>, %arg3: memref<1x32xf32, #tpu.memory_space<vmem>>, %arg4: memref<32x512xf32, #tpu.memory_space<vmem>>, %arg5: memref<512x32xf32, #tpu.memory_space<vmem>>, %arg6: memref<1x512xf32, #tpu.memory_space<vmem>>, %arg7: memref<8x1xi32, #tpu.memory_space<vmem>>, %arg8: memref<8x32xf32, #tpu.memory_space<vmem>>) attributes {dimension_semantics = [#tpu.dimension_semantics<parallel>], iteration_bounds = array<i64: 1>, scalar_prefetch = 0 : i64, scratch_operands = 0 : i64, tpu.core_type = #tpu.core_type<tc>, window_params = [{transform_indices = @transform_0, window_bounds = array<i64: 8, 288>}, {pipeline_mode = #tpu.pipeline_mode<synchronous>, transform_indices = @transform_1, window_bounds = array<i64: 288, 32>}, {pipeline_mode = #tpu.pipeline_mode<synchronous>, transform_indices = @transform_2, window_bounds = array<i64: 1, 32>}, {pipeline_mode = #tpu.pipeline_mode<synchronous>, transform_indices = @transform_3, window_bounds = array<i64: 32, 512>}, {pipeline_mode = #tpu.pipeline_mode<synchronous>, transform_indices = @transform_4, window_bounds = array<i64: 512, 32>}, {pipeline_mode = #tpu.pipeline_mode<synchronous>, transform_indices = @transform_5, window_bounds = array<i64: 1, 512>}, {transform_indices = @transform_6, window_bounds = array<i64: 8, 1>}, {transform_indices = @transform_7, window_bounds = array<i64: 8, 32>}]} {
    %c0 = arith.constant 0 : index
    %c0_0 = arith.constant 0 : index
    %0 = vector.load %arg1[%c0, %c0_0] : memref<8x288xbf16, #tpu.memory_space<vmem>>, vector<8x288xbf16>
    %c0_1 = arith.constant 0 : index
    %c0_2 = arith.constant 0 : index
    %1 = vector.load %arg2[%c0_1, %c0_2] : memref<288x32xbf16, #tpu.memory_space<vmem>>, vector<288x32xbf16>
    %cst = arith.constant dense<0.000000e+00> : vector<8x32xf32>
    %2 = tpu.matmul %0, %1, %cst {dimension_numbers = #tpu.dot_dimension_numbers<[1], [0], [0], [1], [0, 0, 1, 1], [], []>} : vector<8x288xbf16>, vector<288x32xbf16>, vector<8x32xf32> -> vector<8x32xf32>
    %c0_3 = arith.constant 0 : index
    %c0_4 = arith.constant 0 : index
    %3 = vector.load %arg3[%c0_3, %c0_4] : memref<1x32xf32, #tpu.memory_space<vmem>>, vector<1x32xf32>
    %4 = vector.broadcast %3 : vector<1x32xf32> to vector<8x32xf32>
    %5 = arith.addf %2, %4 : vector<8x32xf32>
    %c0_5 = arith.constant 0 : index
    %c0_6 = arith.constant 0 : index
    %6 = vector.load %arg4[%c0_5, %c0_6] : memref<32x512xf32, #tpu.memory_space<vmem>>, vector<32x512xf32>
    %cst_7 = arith.constant dense<0.000000e+00> : vector<8x512xf32>
    %7 = tpu.matmul %5, %6, %cst_7 {dimension_numbers = #tpu.dot_dimension_numbers<[1], [0], [0], [1], [0, 0, 1, 1], [], []>} : vector<8x32xf32>, vector<32x512xf32>, vector<8x512xf32> -> vector<8x512xf32>
    %c0_8 = arith.constant 0 : index
    %c0_9 = arith.constant 0 : index
    %8 = vector.load %arg6[%c0_8, %c0_9] : memref<1x512xf32, #tpu.memory_space<vmem>>, vector<1x512xf32>
    %cst_10 = arith.constant 2.000000e+00 : f32
    %9 = vector.broadcast %cst_10 : f32 to vector<8x512xf32>
    %10 = arith.mulf %9, %7 : vector<8x512xf32>
    %11 = vector.broadcast %8 : vector<1x512xf32> to vector<8x512xf32>
    %12 = arith.subf %11, %10 : vector<8x512xf32>
    %cst_11 = arith.constant dense<0x7F800000> : vector<8xf32>
    %13 = vector.multi_reduction <minimumf>, %12, %cst_11 [1] : vector<8x512xf32> to vector<8xf32>
    %14 = vector.shape_cast %13 : vector<8xf32> to vector<8x1xf32>
    %15 = tpu.iota {dimensions = array<i32: 1>} : vector<8x512xi32>
    %16 = vector.broadcast %14 : vector<8x1xf32> to vector<8x512xf32>
    %17 = arith.cmpf oeq, %12, %16 : vector<8x512xf32>
    %c512_i32 = arith.constant 512 : i32
    %18 = vector.broadcast %c512_i32 : i32 to vector<8x512xi32>
    %19 = arith.select %17, %15, %18 : vector<8x512xi1>, vector<8x512xi32>
    %cst_12 = arith.constant dense<2147483647> : vector<8xi32>
    %20 = vector.multi_reduction <minsi>, %19, %cst_12 [1] : vector<8x512xi32> to vector<8xi32>
    %21 = vector.shape_cast %20 : vector<8xi32> to vector<8x1xi32>
    %c0_13 = arith.constant 0 : index
    %c0_14 = arith.constant 0 : index
    %22 = vector.load %arg7[%c0_13, %c0_14] : memref<8x1xi32, #tpu.memory_space<vmem>>, vector<8x1xi32>
    tpu.vector_store %arg7[%c0_13, %c0_14], %21 {strides = array<i32>} : memref<8x1xi32, #tpu.memory_space<vmem>>, vector<8x1xi32>,
    %23 = vector.shape_cast %20 : vector<8xi32> to vector<8x1xi32>
    %24 = vector.broadcast %23 : vector<8x1xi32> to vector<8x512xi32>
    %25 = arith.cmpi eq, %15, %24 : vector<8x512xi32>
    %26 = arith.extui %25 : vector<8x512xi1> to vector<8x512xi32>
    %27 = arith.sitofp %26 : vector<8x512xi32> to vector<8x512xf32>
    %c0_15 = arith.constant 0 : index
    %c0_16 = arith.constant 0 : index
    %28 = vector.load %arg5[%c0_15, %c0_16] : memref<512x32xf32, #tpu.memory_space<vmem>>, vector<512x32xf32>
    %cst_17 = arith.constant dense<0.000000e+00> : vector<8x32xf32>
    %29 = tpu.matmul %27, %28, %cst_17 {dimension_numbers = #tpu.dot_dimension_numbers<[1], [0], [0], [1], [0, 0, 1, 1], [], []>} : vector<8x512xf32>, vector<512x32xf32>, vector<8x32xf32> -> vector<8x32xf32>
    %c0_18 = arith.constant 0 : index
    %c0_19 = arith.constant 0 : index
    %30 = vector.load %arg8[%c0_18, %c0_19] : memref<8x32xf32, #tpu.memory_space<vmem>>, vector<8x32xf32>
    tpu.vector_store %arg8[%c0_18, %c0_19], %29 {strides = array<i32>} : memref<8x32xf32, #tpu.memory_space<vmem>>, vector<8x32xf32>,
    return
  }
  func.func @transform_0(%arg0: i32) -> (i32, i32) {
    %c0_i32 = arith.constant 0 : i32
    %c0_i32_0 = arith.constant 0 : i32
    return %arg0, %c0_i32 : i32, i32
  }
  func.func @transform_1(%arg0: i32) -> (i32, i32) {
    %c0_i32 = arith.constant 0 : i32
    %c0_i32_0 = arith.constant 0 : i32
    %c0_i32_1 = arith.constant 0 : i32
    return %c0_i32, %c0_i32_0 : i32, i32
  }
  func.func @transform_2(%arg0: i32) -> (i32, i32) {
    %c0_i32 = arith.constant 0 : i32
    %c0_i32_0 = arith.constant 0 : i32
    %c0_i32_1 = arith.constant 0 : i32
    return %c0_i32, %c0_i32_0 : i32, i32
  }
  func.func @transform_3(%arg0: i32) -> (i32, i32) {
    %c0_i32 = arith.constant 0 : i32
    %c0_i32_0 = arith.constant 0 : i32
    %c0_i32_1 = arith.constant 0 : i32
    return %c0_i32, %c0_i32_0 : i32, i32
  }
  func.func @transform_4(%arg0: i32) -> (i32, i32) {
    %c0_i32 = arith.constant 0 : i32
    %c0_i32_0 = arith.constant 0 : i32
    %c0_i32_1 = arith.constant 0 : i32
    return %c0_i32, %c0_i32_0 : i32, i32
  }
  func.func @transform_5(%arg0: i32) -> (i32, i32) {
    %c0_i32 = arith.constant 0 : i32
    %c0_i32_0 = arith.constant 0 : i32
    %c0_i32_1 = arith.constant 0 : i32
    return %c0_i32, %c0_i32_0 : i32, i32
  }
  func.func @transform_6(%arg0: i32) -> (i32, i32) {
    %c0_i32 = arith.constant 0 : i32
    %c0_i32_0 = arith.constant 0 : i32
    return %arg0, %c0_i32 : i32, i32
  }
  func.func @transform_7(%arg0: i32) -> (i32, i32) {
    %c0_i32 = arith.constant 0 : i32
    %c0_i32_0 = arith.constant 0 : i32
    return %arg0, %c0_i32 : i32, i32
  }
}

</mosaic_0001>

<llo_original>
// kernel: vqvae_encoder_forward.4
$region0: #{vqvae_encoder_forward.4}
  #allocation0 [shape = 'u32[]', space=smem, size = 0x4, offset = 0x4, fixed_abs, tag = 'smem constant byte address 0x4 - core index']
  #allocation1 [shape = 'u32[72,128]{1,0:T(1,128)}', space=vmem, size = 0x9000, scoped, tag = 'internal scratch']
  %s0 = inlined_call_operand.vmem [shape: bf16[128,64], index: 0, kind: input, shape index: {}]
  %s1 = inlined_call_operand.vmem [shape: bf16[64,32], index: 1, kind: input, shape index: {}]
  %s2 = inlined_call_operand.vmem [shape: f32[1,32], index: 2, kind: input, shape index: {}]
  %s3 = inlined_call_operand.vmem [shape: bf16[128,32], index: 3, kind: output, shape index: {}]
  %s4 = sld [smem:[#allocation0]]
  $region22: #{vqvae_encoder_forward.4} parent=0
    _
  %s6 = ssub.s32 1, %s4
  %s7 = scalar_select 0, %s6, %s4
  // Predicated region
  $region2: #{vqvae_encoder_forward.4} parent=0 // pred_check
    _
  $region3: #{vqvae_encoder_forward.4} parent=0 // pred_check_branch
    %9 = sbr.rel (0) target = $region5
  $region4: #{vqvae_encoder_forward.4} parent=0 // pred_region
    _
  $region5: #{vqvae_encoder_forward.4} parent=0 // pred_fallthru
    _
  // Predicated region
  $region6: #{vqvae_encoder_forward.4} parent=0 // pred_check
    _
  $region7: #{vqvae_encoder_forward.4} parent=0 // pred_check_branch
    %11 = sbr.rel (0) target = $region9
  $region8: #{vqvae_encoder_forward.4} parent=0 // pred_region
    _
  $region9: #{vqvae_encoder_forward.4} parent=0 // pred_fallthru
    _
  // Predicated region
  $region10: #{vqvae_encoder_forward.4} parent=0 // pred_check
    _
  $region11: #{vqvae_encoder_forward.4} parent=0 // pred_check_branch
    %13 = sbr.rel (0) target = $region13
  $region12: #{vqvae_encoder_forward.4} parent=0 // pred_region
    _
  $region13: #{vqvae_encoder_forward.4} parent=0 // pred_fallthru
    _
  %v15 = vld [vmem:[%s0] sm:$0xf]
  %v16 = vld [vmem:[%s0 + $0x4] sm:$0xf]
  %v17 = vld [vmem:[%s0 + $0x8] sm:$0xf]
  %v18 = vld [vmem:[%s0 + $0xc] sm:$0xf]
  %v19 = vld [vmem:[%s0 + $0x10] sm:$0xf]
  %v20 = vld [vmem:[%s0 + $0x14] sm:$0xf]
  %v21 = vld [vmem:[%s0 + $0x18] sm:$0xf]
  %v22 = vld [vmem:[%s0 + $0x1c] sm:$0xf]
  %v23 = vld [vmem:[%s0 + $0x20] sm:$0xf]
  %v24 = vld [vmem:[%s0 + $0x24] sm:$0xf]
  %v25 = vld [vmem:[%s0 + $0x28] sm:$0xf]
  %v26 = vld [vmem:[%s0 + $0x2c] sm:$0xf]
  %v27 = vld [vmem:[%s0 + $0x30] sm:$0xf]
  %v28 = vld [vmem:[%s0 + $0x34] sm:$0xf]
  %v29 = vld [vmem:[%s0 + $0x38] sm:$0xf]
  %v30 = vld [vmem:[%s0 + $0x3c] sm:$0xf]
  %v31 = vld [vmem:[%s1] sm:$0xf]
  %v32 = vld [vmem:[%s1 + $0x4] sm:$0xf]
  %v33 = vld [vmem:[%s1 + $0x8] sm:$0xf]
  %v34 = vld [vmem:[%s1 + $0xc] sm:$0xf]
  %v35 = vld [vmem:[%s1 + $0x10] sm:$0xf]
  %v36 = vld [vmem:[%s1 + $0x14] sm:$0xf]
  %v37 = vld [vmem:[%s1 + $0x18] sm:$0xf]
  %v38 = vld [vmem:[%s1 + $0x1c] sm:$0xf]
  %v39 = vld [vmem:[%s2] sm:$0x1]
  %v41 = vperm.slane %v39, 0
  %v59 = vunpack.c.l.b16 %v15
  %v60 = vunpack.c.l.b16 %v16
  %v61 = vunpack.c.l.b16 %v17
  %v62 = vunpack.c.l.b16 %v18
  %v63 = vunpack.c.l.b16 %v19
  %v64 = vunpack.c.l.b16 %v20
  %v65 = vunpack.c.l.b16 %v21
  %v66 = vunpack.c.l.b16 %v22
  %v67 = vunpack.c.l.b16 %v23
  %v68 = vunpack.c.l.b16 %v24
  %v69 = vunpack.c.l.b16 %v25
  %v70 = vunpack.c.l.b16 %v26
  %v71 = vunpack.c.l.b16 %v27
  %v72 = vunpack.c.l.b16 %v28
  %v73 = vunpack.c.l.b16 %v29
  %v74 = vunpack.c.l.b16 %v30
  %v75 = vpack.c.b16 %v60, %v59
  %v76 = vpack.c.b16 %v62, %v61
  %v77 = vpack.c.b16 %v64, %v63
  %v78 = vpack.c.b16 %v66, %v65
  %v79 = vpack.c.b16 %v68, %v67
  %v80 = vpack.c.b16 %v70, %v69
  %v81 = vpack.c.b16 %v72, %v71
  %v82 = vpack.c.b16 %v74, %v73
  %v91 = vunpack.c.l.b16 %v31
  %v92 = vunpack.c.l.b16 %v32
  %v93 = vunpack.c.l.b16 %v33
  %v94 = vunpack.c.l.b16 %v34
  %v95 = vunpack.c.l.b16 %v35
  %v96 = vunpack.c.l.b16 %v36
  %v97 = vunpack.c.l.b16 %v37
  %v98 = vunpack.c.l.b16 %v38
  %v99 = vpack.c.b16 %v92, %v91
  %v100 = vpack.c.b16 %v94, %v93
  %v101 = vpack.c.b16 %v96, %v95
  %v102 = vpack.c.b16 %v98, %v97
  %vm107 = vcmask 523264
  %v109 = vsel %vm107, %v75, 0
  %v112 = vsel %vm107, %v76, 0
  %v115 = vsel %vm107, %v77, 0
  %v118 = vsel %vm107, %v78, 0
  %v121 = vsel %vm107, %v79, 0
  %v124 = vsel %vm107, %v80, 0
  %v127 = vsel %vm107, %v81, 0
  %v130 = vsel %vm107, %v82, 0
  %132 = vmatpush.bf16.msra.mxu0 0
  %133 = vmatpush.bf16.msra.mxu0 0
  %134 = vmatpush.bf16.msra.mxu0 0
  %135 = vmatpush.bf16.msra.mxu0 0
  %136 = vmatpush.bf16.msra.mxu0 %v102
  %137 = vmatpush.bf16.msra.mxu0 %v101
  %138 = vmatpush.bf16.msra.mxu0 %v100
  %139 = vmatpush.bf16.msra.mxu0 %v99
  %140 = vmatmul.bf16.gmra.mxu0 %v109
  %v141 = vpop.f32.mrf.mxu0
  %v142 = vadd.f32 %v41, %v141
  %v143 = vpop.f32.mrf.mxu0
  %v144 = vadd.f32 %v41, %v143
  %145 = vmatmul.bf16.gmra.mxu0 %v112
  %v146 = vpop.f32.mrf.mxu0
  %v147 = vadd.f32 %v41, %v146
  %v148 = vpop.f32.mrf.mxu0
  %v149 = vadd.f32 %v41, %v148
  %150 = vmatmul.bf16.gmra.mxu0 %v115
  %v151 = vpop.f32.mrf.mxu0
  %v152 = vadd.f32 %v41, %v151
  %v153 = vpop.f32.mrf.mxu0
  %v154 = vadd.f32 %v41, %v153
  %155 = vmatmul.bf16.gmra.mxu0 %v118
  %v156 = vpop.f32.mrf.mxu0
  %v157 = vadd.f32 %v41, %v156
  %v158 = vpop.f32.mrf.mxu0
  %v159 = vadd.f32 %v41, %v158
  %160 = vmatmul.bf16.gmra.mxu0 %v121
  %v161 = vpop.f32.mrf.mxu0
  %v162 = vadd.f32 %v41, %v161
  %v163 = vpop.f32.mrf.mxu0
  %v164 = vadd.f32 %v41, %v163
  %165 = vmatmul.bf16.gmra.mxu0 %v124
  %v166 = vpop.f32.mrf.mxu0
  %v167 = vadd.f32 %v41, %v166
  %v168 = vpop.f32.mrf.mxu0
  %v169 = vadd.f32 %v41, %v168
  %170 = vmatmul.bf16.gmra.mxu0 %v127
  %v171 = vpop.f32.mrf.mxu0
  %v172 = vadd.f32 %v41, %v171
  %v173 = vpop.f32.mrf.mxu0
  %v174 = vadd.f32 %v41, %v173
  %175 = vmatmul.bf16.gmra.mxu0 %v130
  %v176 = vpop.f32.mrf.mxu0
  %v177 = vadd.f32 %v41, %v176
  %v178 = vpop.f32.mrf.mxu0
  %v179 = vadd.f32 %v41, %v178
  %180 = vdwg.mxu0
  %v181 = vmax.f32 %v142, 0.0
  %v182 = vmax.f32 %v144, 0.0
  %v183 = vmax.f32 %v147, 0.0
  %v184 = vmax.f32 %v149, 0.0
  %v185 = vmax.f32 %v152, 0.0
  %v186 = vmax.f32 %v154, 0.0
  %v187 = vmax.f32 %v157, 0.0
  %v188 = vmax.f32 %v159, 0.0
  %v189 = vmax.f32 %v162, 0.0
  %v190 = vmax.f32 %v164, 0.0
  %v191 = vmax.f32 %v167, 0.0
  %v192 = vmax.f32 %v169, 0.0
  %v193 = vmax.f32 %v172, 0.0
  %v194 = vmax.f32 %v174, 0.0
  %v195 = vmax.f32 %v177, 0.0
  %v196 = vmax.f32 %v179, 0.0
  %v197 = vpack.c.bf16 %v181, %v181
  %v198 = vpack.c.bf16 %v182, %v182
  %v199 = vpack.c.bf16 %v183, %v183
  %v200 = vpack.c.bf16 %v184, %v184
  %v201 = vpack.c.bf16 %v185, %v185
  %v202 = vpack.c.bf16 %v186, %v186
  %v203 = vpack.c.bf16 %v187, %v187
  %v204 = vpack.c.bf16 %v188, %v188
  %v205 = vpack.c.bf16 %v189, %v189
  %v206 = vpack.c.bf16 %v190, %v190
  %v207 = vpack.c.bf16 %v191, %v191
  %v208 = vpack.c.bf16 %v192, %v192
  %v209 = vpack.c.bf16 %v193, %v193
  %v210 = vpack.c.bf16 %v194, %v194
  %v211 = vpack.c.bf16 %v195, %v195
  %v212 = vpack.c.bf16 %v196, %v196
  %vm213 = vcmask 257024
  %214 = vst.msk [vmem:[%s3] sm:$0xf] %vm213, %v197
  %215 = vst.msk [vmem:[%s3 + $0x4] sm:$0xf] %vm213, %v198
  %216 = vst.msk [vmem:[%s3 + $0x8] sm:$0xf] %vm213, %v199
  %217 = vst.msk [vmem:[%s3 + $0xc] sm:$0xf] %vm213, %v200
  %218 = vst.msk [vmem:[%s3 + $0x10] sm:$0xf] %vm213, %v201
  %219 = vst.msk [vmem:[%s3 + $0x14] sm:$0xf] %vm213, %v202
  %220 = vst.msk [vmem:[%s3 + $0x18] sm:$0xf] %vm213, %v203
  %221 = vst.msk [vmem:[%s3 + $0x1c] sm:$0xf] %vm213, %v204
  %222 = vst.msk [vmem:[%s3 + $0x20] sm:$0xf] %vm213, %v205
  %223 = vst.msk [vmem:[%s3 + $0x24] sm:$0xf] %vm213, %v206
  %224 = vst.msk [vmem:[%s3 + $0x28] sm:$0xf] %vm213, %v207
  %225 = vst.msk [vmem:[%s3 + $0x2c] sm:$0xf] %vm213, %v208
  %226 = vst.msk [vmem:[%s3 + $0x30] sm:$0xf] %vm213, %v209
  %227 = vst.msk [vmem:[%s3 + $0x34] sm:$0xf] %vm213, %v210
  %228 = vst.msk [vmem:[%s3 + $0x38] sm:$0xf] %vm213, %v211
  %229 = vst.msk [vmem:[%s3 + $0x3c] sm:$0xf] %vm213, %v212
  // Predicated region
  $region14: #{vqvae_encoder_forward.4} parent=0 // pred_check
    _
  $region15: #{vqvae_encoder_forward.4} parent=0 // pred_check_branch
    %231 = sbr.rel (0) target = $region17
  $region16: #{vqvae_encoder_forward.4} parent=0 // pred_region
    _
  $region17: #{vqvae_encoder_forward.4} parent=0 // pred_fallthru
    _
  // Predicated region
  $region18: #{vqvae_encoder_forward.4} parent=0 // pred_check
    _
  $region19: #{vqvae_encoder_forward.4} parent=0 // pred_check_branch
    %233 = sbr.rel (0) target = $region21
  $region20: #{vqvae_encoder_forward.4} parent=0 // pred_region
    _
  $region21: #{vqvae_encoder_forward.4} parent=0 // pred_fallthru
    _

// kernel: vqvae_encoder_forward.5
$region0: #{vqvae_encoder_forward.5}
  #allocation0 [shape = 'u32[]', space=smem, size = 0x4, offset = 0x4, fixed_abs, tag = 'smem constant byte address 0x4 - core index']
  #allocation1 [shape = 'u32[72,128]{1,0:T(1,128)}', space=vmem, size = 0x9000, scoped, tag = 'internal scratch']
  %s0 = inlined_call_operand.vmem [shape: bf16[32,512], index: 0, kind: input, shape index: {}]
  %s1 = inlined_call_operand.vmem [shape: bf16[512,32], index: 1, kind: input, shape index: {}]
  %s2 = inlined_call_operand.vmem [shape: f32[1,32], index: 2, kind: input, shape index: {}]
  %s3 = inlined_call_operand.vmem [shape: bf16[32,32], index: 3, kind: output, shape index: {}]
  %s4 = sld [smem:[#allocation0]]
  $region22: #{vqvae_encoder_forward.5} parent=0
    _
  %s6 = ssub.s32 1, %s4
  %s7 = scalar_select 0, %s6, %s4
  // Predicated region
  $region2: #{vqvae_encoder_forward.5} parent=0 // pred_check
    _
  $region3: #{vqvae_encoder_forward.5} parent=0 // pred_check_branch
    %9 = sbr.rel (0) target = $region5
  $region4: #{vqvae_encoder_forward.5} parent=0 // pred_region
    _
  $region5: #{vqvae_encoder_forward.5} parent=0 // pred_fallthru
    _
  // Predicated region
  $region6: #{vqvae_encoder_forward.5} parent=0 // pred_check
    _
  $region7: #{vqvae_encoder_forward.5} parent=0 // pred_check_branch
    %11 = sbr.rel (0) target = $region9
  $region8: #{vqvae_encoder_forward.5} parent=0 // pred_region
    _
  $region9: #{vqvae_encoder_forward.5} parent=0 // pred_fallthru
    _
  // Predicated region
  $region10: #{vqvae_encoder_forward.5} parent=0 // pred_check
    _
  $region11: #{vqvae_encoder_forward.5} parent=0 // pred_check_branch
    %13 = sbr.rel (0) target = $region13
  $region12: #{vqvae_encoder_forward.5} parent=0 // pred_region
    _
  $region13: #{vqvae_encoder_forward.5} parent=0 // pred_fallthru
    _
  %v14 = vld [vmem:[%s0] sm:$0xff]
  %v15 = vld [vmem:[%s0 + $0x8] sm:$0xff]
  %v16 = vld [vmem:[%s0 + $0x10] sm:$0xff]
  %v17 = vld [vmem:[%s0 + $0x18] sm:$0xff]
  %v18 = vld [vmem:[%s0 + $0x20] sm:$0xff]
  %v19 = vld [vmem:[%s0 + $0x28] sm:$0xff]
  %v20 = vld [vmem:[%s0 + $0x30] sm:$0xff]
  %v21 = vld [vmem:[%s0 + $0x38] sm:$0xff]
  %v22 = vld [vmem:[%s1] sm:$0xf]
  %v23 = vld [vmem:[%s1 + $0x4] sm:$0xf]
  %v24 = vld [vmem:[%s1 + $0x8] sm:$0xf]
  %v25 = vld [vmem:[%s1 + $0xc] sm:$0xf]
  %v26 = vld [vmem:[%s1 + $0x10] sm:$0xf]
  %v27 = vld [vmem:[%s1 + $0x14] sm:$0xf]
  %v28 = vld [vmem:[%s1 + $0x18] sm:$0xf]
  %v29 = vld [vmem:[%s1 + $0x1c] sm:$0xf]
  %v30 = vld [vmem:[%s1 + $0x20] sm:$0xf]
  %v31 = vld [vmem:[%s1 + $0x24] sm:$0xf]
  %v32 = vld [vmem:[%s1 + $0x28] sm:$0xf]
  %v33 = vld [vmem:[%s1 + $0x2c] sm:$0xf]
  %v34 = vld [vmem:[%s1 + $0x30] sm:$0xf]
  %v35 = vld [vmem:[%s1 + $0x34] sm:$0xf]
  %v36 = vld [vmem:[%s1 + $0x38] sm:$0xf]
  %v37 = vld [vmem:[%s1 + $0x3c] sm:$0xf]
  %v38 = vld [vmem:[%s1 + $0x40] sm:$0xf]
  %v39 = vld [vmem:[%s1 + $0x44] sm:$0xf]
  %v40 = vld [vmem:[%s1 + $0x48] sm:$0xf]
  %v41 = vld [vmem:[%s1 + $0x4c] sm:$0xf]
  %v42 = vld [vmem:[%s1 + $0x50] sm:$0xf]
  %v43 = vld [vmem:[%s1 + $0x54] sm:$0xf]
  %v44 = vld [vmem:[%s1 + $0x58] sm:$0xf]
  %v45 = vld [vmem:[%s1 + $0x5c] sm:$0xf]
  %v46 = vld [vmem:[%s1 + $0x60] sm:$0xf]
  %v47 = vld [vmem:[%s1 + $0x64] sm:$0xf]
  %v48 = vld [vmem:[%s1 + $0x68] sm:$0xf]
  %v49 = vld [vmem:[%s1 + $0x6c] sm:$0xf]
  %v50 = vld [vmem:[%s1 + $0x70] sm:$0xf]
  %v51 = vld [vmem:[%s1 + $0x74] sm:$0xf]
  %v52 = vld [vmem:[%s1 + $0x78] sm:$0xf]
  %v53 = vld [vmem:[%s1 + $0x7c] sm:$0xf]
  %v54 = vld [vmem:[%s1 + $0x80] sm:$0xf]
  %v55 = vld [vmem:[%s1 + $0x84] sm:$0xf]
  %v56 = vld [vmem:[%s1 + $0x88] sm:$0xf]
  %v57 = vld [vmem:[%s1 + $0x8c] sm:$0xf]
  %v58 = vld [vmem:[%s1 + $0x90] sm:$0xf]
  %v59 = vld [vmem:[%s1 + $0x94] sm:$0xf]
  %v60 = vld [vmem:[%s1 + $0x98] sm:$0xf]
  %v61 = vld [vmem:[%s1 + $0x9c] sm:$0xf]
  %v62 = vld [vmem:[%s1 + $0xa0] sm:$0xf]
  %v63 = vld [vmem:[%s1 + $0xa4] sm:$0xf]
  %v64 = vld [vmem:[%s1 + $0xa8] sm:$0xf]
  %v65 = vld [vmem:[%s1 + $0xac] sm:$0xf]
  %v66 = vld [vmem:[%s1 + $0xb0] sm:$0xf]
  %v67 = vld [vmem:[%s1 + $0xb4] sm:$0xf]
  %v68 = vld [vmem:[%s1 + $0xb8] sm:$0xf]
  %v69 = vld [vmem:[%s1 + $0xbc] sm:$0xf]
  %v70 = vld [vmem:[%s1 + $0xc0] sm:$0xf]
  %v71 = vld [vmem:[%s1 + $0xc4] sm:$0xf]
  %v72 = vld [vmem:[%s1 + $0xc8] sm:$0xf]
  %v73 = vld [vmem:[%s1 + $0xcc] sm:$0xf]
  %v74 = vld [vmem:[%s1 + $0xd0] sm:$0xf]
  %v75 = vld [vmem:[%s1 + $0xd4] sm:$0xf]
  %v76 = vld [vmem:[%s1 + $0xd8] sm:$0xf]
  %v77 = vld [vmem:[%s1 + $0xdc] sm:$0xf]
  %v78 = vld [vmem:[%s1 + $0xe0] sm:$0xf]
  %v79 = vld [vmem:[%s1 + $0xe4] sm:$0xf]
  %v80 = vld [vmem:[%s1 + $0xe8] sm:$0xf]
  %v81 = vld [vmem:[%s1 + $0xec] sm:$0xf]
  %v82 = vld [vmem:[%s1 + $0xf0] sm:$0xf]
  %v83 = vld [vmem:[%s1 + $0xf4] sm:$0xf]
  %v84 = vld [vmem:[%s1 + $0xf8] sm:$0xf]
  %v85 = vld [vmem:[%s1 + $0xfc] sm:$0xf]
  %v86 = vld [vmem:[%s2] sm:$0x1]
  %v88 = vperm.slane %v86, 0
  %v98 = vunpack.c.l.b16 %v14
  %v99 = vunpack.c.h.b16 %v14
  %v100 = vunpack.c.l.b16 %v15
  %v101 = vunpack.c.h.b16 %v15
  %v102 = vunpack.c.l.b16 %v16
  %v103 = vunpack.c.h.b16 %v16
  %v104 = vunpack.c.l.b16 %v17
  %v105 = vunpack.c.h.b16 %v17
  %v106 = vunpack.c.l.b16 %v18
  %v107 = vunpack.c.h.b16 %v18
  %v108 = vunpack.c.l.b16 %v19
  %v109 = vunpack.c.h.b16 %v19
  %v110 = vunpack.c.l.b16 %v20
  %v111 = vunpack.c.h.b16 %v20
  %v112 = vunpack.c.l.b16 %v21
  %v113 = vunpack.c.h.b16 %v21
  %v114 = vpack.c.b16 %v102, %v98
  %v115 = vpack.c.b16 %v103, %v99
  %v116 = vpack.c.b16 %v104, %v100
  %v117 = vpack.c.b16 %v105, %v101
  %v118 = vpack.c.b16 %v110, %v106
  %v119 = vpack.c.b16 %v111, %v107
  %v120 = vpack.c.b16 %v112, %v108
  %v121 = vpack.c.b16 %v113, %v109
  %v194 = vunpack.c.l.b16 %v22
  %v195 = vunpack.c.l.b16 %v23
  %v196 = vunpack.c.l.b16 %v24
  %v197 = vunpack.c.l.b16 %v25
  %v198 = vunpack.c.l.b16 %v26
  %v199 = vunpack.c.l.b16 %v27
  %v200 = vunpack.c.l.b16 %v28
  %v201 = vunpack.c.l.b16 %v29
  %v202 = vunpack.c.l.b16 %v30
  %v203 = vunpack.c.l.b16 %v31
  %v204 = vunpack.c.l.b16 %v32
  %v205 = vunpack.c.l.b16 %v33
  %v206 = vunpack.c.l.b16 %v34
  %v207 = vunpack.c.l.b16 %v35
  %v208 = vunpack.c.l.b16 %v36
  %v209 = vunpack.c.l.b16 %v37
  %v210 = vunpack.c.l.b16 %v38
  %v211 = vunpack.c.l.b16 %v39
  %v212 = vunpack.c.l.b16 %v40
  %v213 = vunpack.c.l.b16 %v41
  %v214 = vunpack.c.l.b16 %v42
  %v215 = vunpack.c.l.b16 %v43
  %v216 = vunpack.c.l.b16 %v44
  %v217 = vunpack.c.l.b16 %v45
  %v218 = vunpack.c.l.b16 %v46
  %v219 = vunpack.c.l.b16 %v47
  %v220 = vunpack.c.l.b16 %v48
  %v221 = vunpack.c.l.b16 %v49
  %v222 = vunpack.c.l.b16 %v50
  %v223 = vunpack.c.l.b16 %v51
  %v224 = vunpack.c.l.b16 %v52
  %v225 = vunpack.c.l.b16 %v53
  %v226 = vunpack.c.l.b16 %v54
  %v227 = vunpack.c.l.b16 %v55
  %v228 = vunpack.c.l.b16 %v56
  %v229 = vunpack.c.l.b16 %v57
  %v230 = vunpack.c.l.b16 %v58
  %v231 = vunpack.c.l.b16 %v59
  %v232 = vunpack.c.l.b16 %v60
  %v233 = vunpack.c.l.b16 %v61
  %v234 = vunpack.c.l.b16 %v62
  %v235 = vunpack.c.l.b16 %v63
  %v236 = vunpack.c.l.b16 %v64
  %v237 = vunpack.c.l.b16 %v65
  %v238 = vunpack.c.l.b16 %v66
  %v239 = vunpack.c.l.b16 %v67
  %v240 = vunpack.c.l.b16 %v68
  %v241 = vunpack.c.l.b16 %v69
  %v242 = vunpack.c.l.b16 %v70
  %v243 = vunpack.c.l.b16 %v71
  %v244 = vunpack.c.l.b16 %v72
  %v245 = vunpack.c.l.b16 %v73
  %v246 = vunpack.c.l.b16 %v74
  %v247 = vunpack.c.l.b16 %v75
  %v248 = vunpack.c.l.b16 %v76
  %v249 = vunpack.c.l.b16 %v77
  %v250 = vunpack.c.l.b16 %v78
  %v251 = vunpack.c.l.b16 %v79
  %v252 = vunpack.c.l.b16 %v80
  %v253 = vunpack.c.l.b16 %v81
  %v254 = vunpack.c.l.b16 %v82
  %v255 = vunpack.c.l.b16 %v83
  %v256 = vunpack.c.l.b16 %v84
  %v257 = vunpack.c.l.b16 %v85
  %v258 = vpack.c.b16 %v195, %v194
  %v259 = vpack.c.b16 %v197, %v196
  %v260 = vpack.c.b16 %v199, %v198
  %v261 = vpack.c.b16 %v201, %v200
  %v262 = vpack.c.b16 %v203, %v202
  %v263 = vpack.c.b16 %v205, %v204
  %v264 = vpack.c.b16 %v207, %v206
  %v265 = vpack.c.b16 %v209, %v208
  %v266 = vpack.c.b16 %v211, %v210
  %v267 = vpack.c.b16 %v213, %v212
  %v268 = vpack.c.b16 %v215, %v214
  %v269 = vpack.c.b16 %v217, %v216
  %v270 = vpack.c.b16 %v219, %v218
  %v271 = vpack.c.b16 %v221, %v220
  %v272 = vpack.c.b16 %v223, %v222
  %v273 = vpack.c.b16 %v225, %v224
  %v274 = vpack.c.b16 %v227, %v226
  %v275 = vpack.c.b16 %v229, %v228
  %v276 = vpack.c.b16 %v231, %v230
  %v277 = vpack.c.b16 %v233, %v232
  %v278 = vpack.c.b16 %v235, %v234
  %v279 = vpack.c.b16 %v237, %v236
  %v280 = vpack.c.b16 %v239, %v238
  %v281 = vpack.c.b16 %v241, %v240
  %v282 = vpack.c.b16 %v243, %v242
  %v283 = vpack.c.b16 %v245, %v244
  %v284 = vpack.c.b16 %v247, %v246
  %v285 = vpack.c.b16 %v249, %v248
  %v286 = vpack.c.b16 %v251, %v250
  %v287 = vpack.c.b16 %v253, %v252
  %v288 = vpack.c.b16 %v255, %v254
  %v289 = vpack.c.b16 %v257, %v256
  %322 = vmatpush.bf16.msra.mxu0 %v265
  %323 = vmatpush.bf16.msra.mxu0 %v264
  %324 = vmatpush.bf16.msra.mxu0 %v263
  %325 = vmatpush.bf16.msra.mxu0 %v262
  %326 = vmatpush.bf16.msra.mxu0 %v261
  %327 = vmatpush.bf16.msra.mxu0 %v260
  %328 = vmatpush.bf16.msra.mxu0 %v259
  %329 = vmatpush.bf16.msra.mxu0 %v258
  %330 = vmatmul.bf16.gmra.mxu0 %v114
  %v331 = vpop.f32.mrf.mxu0
  %v332 = vadd.f32 %v88, %v331
  %v333 = vpop.f32.mrf.mxu0
  %v334 = vadd.f32 %v88, %v333
  %335 = vmatmul.bf16.gmra.mxu0 %v118
  %v336 = vpop.f32.mrf.mxu0
  %v337 = vadd.f32 %v88, %v336
  %v338 = vpop.f32.mrf.mxu0
  %v339 = vadd.f32 %v88, %v338
  %340 = vdwg.mxu0
  %341 = vmatpush.bf16.msra.mxu0 %v273
  %342 = vmatpush.bf16.msra.mxu0 %v272
  %343 = vmatpush.bf16.msra.mxu0 %v271
  %344 = vmatpush.bf16.msra.mxu0 %v270
  %345 = vmatpush.bf16.msra.mxu0 %v269
  %346 = vmatpush.bf16.msra.mxu0 %v268
  %347 = vmatpush.bf16.msra.mxu0 %v267
  %348 = vmatpush.bf16.msra.mxu0 %v266
  %349 = vmatmul.bf16.gmra.mxu0 %v115
  %v350 = vpop.f32.mrf.mxu0
  %v351 = vadd.f32 %v332, %v350
  %v352 = vpop.f32.mrf.mxu0
  %v353 = vadd.f32 %v334, %v352
  %354 = vmatmul.bf16.gmra.mxu0 %v119
  %v355 = vpop.f32.mrf.mxu0
  %v356 = vadd.f32 %v337, %v355
  %v357 = vpop.f32.mrf.mxu0
  %v358 = vadd.f32 %v339, %v357
  %359 = vdwg.mxu0
  %360 = vmatpush.bf16.msra.mxu0 %v281
  %361 = vmatpush.bf16.msra.mxu0 %v280
  %362 = vmatpush.bf16.msra.mxu0 %v279
  %363 = vmatpush.bf16.msra.mxu0 %v278
  %364 = vmatpush.bf16.msra.mxu0 %v277
  %365 = vmatpush.bf16.msra.mxu0 %v276
  %366 = vmatpush.bf16.msra.mxu0 %v275
  %367 = vmatpush.bf16.msra.mxu0 %v274
  %368 = vmatmul.bf16.gmra.mxu0 %v116
  %v369 = vpop.f32.mrf.mxu0
  %v370 = vadd.f32 %v351, %v369
  %v371 = vpop.f32.mrf.mxu0
  %v372 = vadd.f32 %v353, %v371
  %373 = vmatmul.bf16.gmra.mxu0 %v120
  %v374 = vpop.f32.mrf.mxu0
  %v375 = vadd.f32 %v356, %v374
  %v376 = vpop.f32.mrf.mxu0
  %v377 = vadd.f32 %v358, %v376
  %378 = vdwg.mxu0
  %379 = vmatpush.bf16.msra.mxu0 %v289
  %380 = vmatpush.bf16.msra.mxu0 %v288
  %381 = vmatpush.bf16.msra.mxu0 %v287
  %382 = vmatpush.bf16.msra.mxu0 %v286
  %383 = vmatpush.bf16.msra.mxu0 %v285
  %384 = vmatpush.bf16.msra.mxu0 %v284
  %385 = vmatpush.bf16.msra.mxu0 %v283
  %386 = vmatpush.bf16.msra.mxu0 %v282
  %387 = vmatmul.bf16.gmra.mxu0 %v117
  %v388 = vpop.f32.mrf.mxu0
  %v389 = vadd.f32 %v370, %v388
  %v390 = vpop.f32.mrf.mxu0
  %v391 = vadd.f32 %v372, %v390
  %392 = vmatmul.bf16.gmra.mxu0 %v121
  %v393 = vpop.f32.mrf.mxu0
  %v394 = vadd.f32 %v375, %v393
  %v395 = vpop.f32.mrf.mxu0
  %v396 = vadd.f32 %v377, %v395
  %397 = vdwg.mxu0
  %v398 = vmax.f32 %v389, 0.0
  %v399 = vmax.f32 %v391, 0.0
  %v400 = vmax.f32 %v394, 0.0
  %v401 = vmax.f32 %v396, 0.0
  %v402 = vpack.c.bf16 %v398, %v398
  %v403 = vpack.c.bf16 %v399, %v399
  %v404 = vpack.c.bf16 %v400, %v400
  %v405 = vpack.c.bf16 %v401, %v401
  %vm406 = vcmask 257024
  %407 = vst.msk [vmem:[%s3] sm:$0xf] %vm406, %v402
  %408 = vst.msk [vmem:[%s3 + $0x4] sm:$0xf] %vm406, %v403
  %409 = vst.msk [vmem:[%s3 + $0x8] sm:$0xf] %vm406, %v404
  %410 = vst.msk [vmem:[%s3 + $0xc] sm:$0xf] %vm406, %v405
  // Predicated region
  $region14: #{vqvae_encoder_forward.5} parent=0 // pred_check
    _
  $region15: #{vqvae_encoder_forward.5} parent=0 // pred_check_branch
    %412 = sbr.rel (0) target = $region17
  $region16: #{vqvae_encoder_forward.5} parent=0 // pred_region
    _
  $region17: #{vqvae_encoder_forward.5} parent=0 // pred_fallthru
    _
  // Predicated region
  $region18: #{vqvae_encoder_forward.5} parent=0 // pred_check
    _
  $region19: #{vqvae_encoder_forward.5} parent=0 // pred_check_branch
    %414 = sbr.rel (0) target = $region21
  $region20: #{vqvae_encoder_forward.5} parent=0 // pred_region
    _
  $region21: #{vqvae_encoder_forward.5} parent=0 // pred_fallthru
    _

// kernel: vqvae_encoder_forward.6
$region0: #{vqvae_encoder_forward.6}
  #allocation0 [shape = 'u32[]', space=smem, size = 0x4, offset = 0x4, fixed_abs, tag = 'smem constant byte address 0x4 - core index']
  #allocation1 [shape = 'u32[72,128]{1,0:T(1,128)}', space=vmem, size = 0x9000, scoped, tag = 'internal scratch']
  %s0 = inlined_call_operand.vmem [shape: bf16[8,512], index: 0, kind: input, shape index: {}]
  %s1 = inlined_call_operand.vmem [shape: bf16[512,32], index: 1, kind: input, shape index: {}]
  %s2 = inlined_call_operand.vmem [shape: f32[1,32], index: 2, kind: input, shape index: {}]
  %s3 = inlined_call_operand.vmem [shape: bf16[8,32], index: 3, kind: output, shape index: {}]
  %s4 = sld [smem:[#allocation0]]
  $region22: #{vqvae_encoder_forward.6} parent=0
    _
  %s6 = ssub.s32 1, %s4
  %s7 = scalar_select 0, %s6, %s4
  // Predicated region
  $region2: #{vqvae_encoder_forward.6} parent=0 // pred_check
    _
  $region3: #{vqvae_encoder_forward.6} parent=0 // pred_check_branch
    %9 = sbr.rel (0) target = $region5
  $region4: #{vqvae_encoder_forward.6} parent=0 // pred_region
    _
  $region5: #{vqvae_encoder_forward.6} parent=0 // pred_fallthru
    _
  // Predicated region
  $region6: #{vqvae_encoder_forward.6} parent=0 // pred_check
    _
  $region7: #{vqvae_encoder_forward.6} parent=0 // pred_check_branch
    %11 = sbr.rel (0) target = $region9
  $region8: #{vqvae_encoder_forward.6} parent=0 // pred_region
    _
  $region9: #{vqvae_encoder_forward.6} parent=0 // pred_fallthru
    _
  // Predicated region
  $region10: #{vqvae_encoder_forward.6} parent=0 // pred_check
    _
  $region11: #{vqvae_encoder_forward.6} parent=0 // pred_check_branch
    %13 = sbr.rel (0) target = $region13
  $region12: #{vqvae_encoder_forward.6} parent=0 // pred_region
    _
  $region13: #{vqvae_encoder_forward.6} parent=0 // pred_fallthru
    _
  %v14 = vld [vmem:[%s0] sm:$0xff]
  %v15 = vld [vmem:[%s0 + $0x8] sm:$0xff]
  %v16 = vld [vmem:[%s1] sm:$0xf]
  %v17 = vld [vmem:[%s1 + $0x4] sm:$0xf]
  %v18 = vld [vmem:[%s1 + $0x8] sm:$0xf]
  %v19 = vld [vmem:[%s1 + $0xc] sm:$0xf]
  %v20 = vld [vmem:[%s1 + $0x10] sm:$0xf]
  %v21 = vld [vmem:[%s1 + $0x14] sm:$0xf]
  %v22 = vld [vmem:[%s1 + $0x18] sm:$0xf]
  %v23 = vld [vmem:[%s1 + $0x1c] sm:$0xf]
  %v24 = vld [vmem:[%s1 + $0x20] sm:$0xf]
  %v25 = vld [vmem:[%s1 + $0x24] sm:$0xf]
  %v26 = vld [vmem:[%s1 + $0x28] sm:$0xf]
  %v27 = vld [vmem:[%s1 + $0x2c] sm:$0xf]
  %v28 = vld [vmem:[%s1 + $0x30] sm:$0xf]
  %v29 = vld [vmem:[%s1 + $0x34] sm:$0xf]
  %v30 = vld [vmem:[%s1 + $0x38] sm:$0xf]
  %v31 = vld [vmem:[%s1 + $0x3c] sm:$0xf]
  %v32 = vld [vmem:[%s1 + $0x40] sm:$0xf]
  %v33 = vld [vmem:[%s1 + $0x44] sm:$0xf]
  %v34 = vld [vmem:[%s1 + $0x48] sm:$0xf]
  %v35 = vld [vmem:[%s1 + $0x4c] sm:$0xf]
  %v36 = vld [vmem:[%s1 + $0x50] sm:$0xf]
  %v37 = vld [vmem:[%s1 + $0x54] sm:$0xf]
  %v38 = vld [vmem:[%s1 + $0x58] sm:$0xf]
  %v39 = vld [vmem:[%s1 + $0x5c] sm:$0xf]
  %v40 = vld [vmem:[%s1 + $0x60] sm:$0xf]
  %v41 = vld [vmem:[%s1 + $0x64] sm:$0xf]
  %v42 = vld [vmem:[%s1 + $0x68] sm:$0xf]
  %v43 = vld [vmem:[%s1 + $0x6c] sm:$0xf]
  %v44 = vld [vmem:[%s1 + $0x70] sm:$0xf]
  %v45 = vld [vmem:[%s1 + $0x74] sm:$0xf]
  %v46 = vld [vmem:[%s1 + $0x78] sm:$0xf]
  %v47 = vld [vmem:[%s1 + $0x7c] sm:$0xf]
  %v48 = vld [vmem:[%s1 + $0x80] sm:$0xf]
  %v49 = vld [vmem:[%s1 + $0x84] sm:$0xf]
  %v50 = vld [vmem:[%s1 + $0x88] sm:$0xf]
  %v51 = vld [vmem:[%s1 + $0x8c] sm:$0xf]
  %v52 = vld [vmem:[%s1 + $0x90] sm:$0xf]
  %v53 = vld [vmem:[%s1 + $0x94] sm:$0xf]
  %v54 = vld [vmem:[%s1 + $0x98] sm:$0xf]
  %v55 = vld [vmem:[%s1 + $0x9c] sm:$0xf]
  %v56 = vld [vmem:[%s1 + $0xa0] sm:$0xf]
  %v57 = vld [vmem:[%s1 + $0xa4] sm:$0xf]
  %v58 = vld [vmem:[%s1 + $0xa8] sm:$0xf]
  %v59 = vld [vmem:[%s1 + $0xac] sm:$0xf]
  %v60 = vld [vmem:[%s1 + $0xb0] sm:$0xf]
  %v61 = vld [vmem:[%s1 + $0xb4] sm:$0xf]
  %v62 = vld [vmem:[%s1 + $0xb8] sm:$0xf]
  %v63 = vld [vmem:[%s1 + $0xbc] sm:$0xf]
  %v64 = vld [vmem:[%s1 + $0xc0] sm:$0xf]
  %v65 = vld [vmem:[%s1 + $0xc4] sm:$0xf]
  %v66 = vld [vmem:[%s1 + $0xc8] sm:$0xf]
  %v67 = vld [vmem:[%s1 + $0xcc] sm:$0xf]
  %v68 = vld [vmem:[%s1 + $0xd0] sm:$0xf]
  %v69 = vld [vmem:[%s1 + $0xd4] sm:$0xf]
  %v70 = vld [vmem:[%s1 + $0xd8] sm:$0xf]
  %v71 = vld [vmem:[%s1 + $0xdc] sm:$0xf]
  %v72 = vld [vmem:[%s1 + $0xe0] sm:$0xf]
  %v73 = vld [vmem:[%s1 + $0xe4] sm:$0xf]
  %v74 = vld [vmem:[%s1 + $0xe8] sm:$0xf]
  %v75 = vld [vmem:[%s1 + $0xec] sm:$0xf]
  %v76 = vld [vmem:[%s1 + $0xf0] sm:$0xf]
  %v77 = vld [vmem:[%s1 + $0xf4] sm:$0xf]
  %v78 = vld [vmem:[%s1 + $0xf8] sm:$0xf]
  %v79 = vld [vmem:[%s1 + $0xfc] sm:$0xf]
  %v80 = vld [vmem:[%s2] sm:$0x1]
  %v82 = vperm.slane %v80, 0
  %v86 = vunpack.c.l.b16 %v14
  %v87 = vunpack.c.h.b16 %v14
  %v88 = vunpack.c.l.b16 %v15
  %v89 = vunpack.c.h.b16 %v15
  %v90 = vpack.c.b16 %v86, %v86
  %v91 = vpack.c.b16 %v87, %v87
  %v92 = vpack.c.b16 %v88, %v88
  %v93 = vpack.c.b16 %v89, %v89
  %v162 = vunpack.c.l.b16 %v16
  %v163 = vunpack.c.l.b16 %v17
  %v164 = vunpack.c.l.b16 %v18
  %v165 = vunpack.c.l.b16 %v19
  %v166 = vunpack.c.l.b16 %v20
  %v167 = vunpack.c.l.b16 %v21
  %v168 = vunpack.c.l.b16 %v22
  %v169 = vunpack.c.l.b16 %v23
  %v170 = vunpack.c.l.b16 %v24
  %v171 = vunpack.c.l.b16 %v25
  %v172 = vunpack.c.l.b16 %v26
  %v173 = vunpack.c.l.b16 %v27
  %v174 = vunpack.c.l.b16 %v28
  %v175 = vunpack.c.l.b16 %v29
  %v176 = vunpack.c.l.b16 %v30
  %v177 = vunpack.c.l.b16 %v31
  %v178 = vunpack.c.l.b16 %v32
  %v179 = vunpack.c.l.b16 %v33
  %v180 = vunpack.c.l.b16 %v34
  %v181 = vunpack.c.l.b16 %v35
  %v182 = vunpack.c.l.b16 %v36
  %v183 = vunpack.c.l.b16 %v37
  %v184 = vunpack.c.l.b16 %v38
  %v185 = vunpack.c.l.b16 %v39
  %v186 = vunpack.c.l.b16 %v40
  %v187 = vunpack.c.l.b16 %v41
  %v188 = vunpack.c.l.b16 %v42
  %v189 = vunpack.c.l.b16 %v43
  %v190 = vunpack.c.l.b16 %v44
  %v191 = vunpack.c.l.b16 %v45
  %v192 = vunpack.c.l.b16 %v46
  %v193 = vunpack.c.l.b16 %v47
  %v194 = vunpack.c.l.b16 %v48
  %v195 = vunpack.c.l.b16 %v49
  %v196 = vunpack.c.l.b16 %v50
  %v197 = vunpack.c.l.b16 %v51
  %v198 = vunpack.c.l.b16 %v52
  %v199 = vunpack.c.l.b16 %v53
  %v200 = vunpack.c.l.b16 %v54
  %v201 = vunpack.c.l.b16 %v55
  %v202 = vunpack.c.l.b16 %v56
  %v203 = vunpack.c.l.b16 %v57
  %v204 = vunpack.c.l.b16 %v58
  %v205 = vunpack.c.l.b16 %v59
  %v206 = vunpack.c.l.b16 %v60
  %v207 = vunpack.c.l.b16 %v61
  %v208 = vunpack.c.l.b16 %v62
  %v209 = vunpack.c.l.b16 %v63
  %v210 = vunpack.c.l.b16 %v64
  %v211 = vunpack.c.l.b16 %v65
  %v212 = vunpack.c.l.b16 %v66
  %v213 = vunpack.c.l.b16 %v67
  %v214 = vunpack.c.l.b16 %v68
  %v215 = vunpack.c.l.b16 %v69
  %v216 = vunpack.c.l.b16 %v70
  %v217 = vunpack.c.l.b16 %v71
  %v218 = vunpack.c.l.b16 %v72
  %v219 = vunpack.c.l.b16 %v73
  %v220 = vunpack.c.l.b16 %v74
  %v221 = vunpack.c.l.b16 %v75
  %v222 = vunpack.c.l.b16 %v76
  %v223 = vunpack.c.l.b16 %v77
  %v224 = vunpack.c.l.b16 %v78
  %v225 = vunpack.c.l.b16 %v79
  %v226 = vpack.c.b16 %v163, %v162
  %v227 = vpack.c.b16 %v165, %v164
  %v228 = vpack.c.b16 %v167, %v166
  %v229 = vpack.c.b16 %v169, %v168
  %v230 = vpack.c.b16 %v171, %v170
  %v231 = vpack.c.b16 %v173, %v172
  %v232 = vpack.c.b16 %v175, %v174
  %v233 = vpack.c.b16 %v177, %v176
  %v234 = vpack.c.b16 %v179, %v178
  %v235 = vpack.c.b16 %v181, %v180
  %v236 = vpack.c.b16 %v183, %v182
  %v237 = vpack.c.b16 %v185, %v184
  %v238 = vpack.c.b16 %v187, %v186
  %v239 = vpack.c.b16 %v189, %v188
  %v240 = vpack.c.b16 %v191, %v190
  %v241 = vpack.c.b16 %v193, %v192
  %v242 = vpack.c.b16 %v195, %v194
  %v243 = vpack.c.b16 %v197, %v196
  %v244 = vpack.c.b16 %v199, %v198
  %v245 = vpack.c.b16 %v201, %v200
  %v246 = vpack.c.b16 %v203, %v202
  %v247 = vpack.c.b16 %v205, %v204
  %v248 = vpack.c.b16 %v207, %v206
  %v249 = vpack.c.b16 %v209, %v208
  %v250 = vpack.c.b16 %v211, %v210
  %v251 = vpack.c.b16 %v213, %v212
  %v252 = vpack.c.b16 %v215, %v214
  %v253 = vpack.c.b16 %v217, %v216
  %v254 = vpack.c.b16 %v219, %v218
  %v255 = vpack.c.b16 %v221, %v220
  %v256 = vpack.c.b16 %v223, %v222
  %v257 = vpack.c.b16 %v225, %v224
  %290 = vmatpush.bf16.msra.mxu0 %v233
  %291 = vmatpush.bf16.msra.mxu0 %v232
  %292 = vmatpush.bf16.msra.mxu0 %v231
  %293 = vmatpush.bf16.msra.mxu0 %v230
  %294 = vmatpush.bf16.msra.mxu0 %v229
  %295 = vmatpush.bf16.msra.mxu0 %v228
  %296 = vmatpush.bf16.msra.mxu0 %v227
  %297 = vmatpush.bf16.msra.mxu0 %v226
  %298 = vmatmul.bf16.gmra.mxu0 %v90
  %v299 = vpop.f32.mrf.mxu0
  %v300 = vadd.f32 %v82, %v299
  %v301 = vpop.f32.mrf.mxu0
  %302 = vdwg.mxu0
  %303 = vmatpush.bf16.msra.mxu0 %v241
  %304 = vmatpush.bf16.msra.mxu0 %v240
  %305 = vmatpush.bf16.msra.mxu0 %v239
  %306 = vmatpush.bf16.msra.mxu0 %v238
  %307 = vmatpush.bf16.msra.mxu0 %v237
  %308 = vmatpush.bf16.msra.mxu0 %v236
  %309 = vmatpush.bf16.msra.mxu0 %v235
  %310 = vmatpush.bf16.msra.mxu0 %v234
  %311 = vmatmul.bf16.gmra.mxu0 %v91
  %v312 = vpop.f32.mrf.mxu0
  %v313 = vadd.f32 %v300, %v312
  %v314 = vpop.f32.mrf.mxu0
  %315 = vdwg.mxu0
  %316 = vmatpush.bf16.msra.mxu0 %v249
  %317 = vmatpush.bf16.msra.mxu0 %v248
  %318 = vmatpush.bf16.msra.mxu0 %v247
  %319 = vmatpush.bf16.msra.mxu0 %v246
  %320 = vmatpush.bf16.msra.mxu0 %v245
  %321 = vmatpush.bf16.msra.mxu0 %v244
  %322 = vmatpush.bf16.msra.mxu0 %v243
  %323 = vmatpush.bf16.msra.mxu0 %v242
  %324 = vmatmul.bf16.gmra.mxu0 %v92
  %v325 = vpop.f32.mrf.mxu0
  %v326 = vadd.f32 %v313, %v325
  %v327 = vpop.f32.mrf.mxu0
  %328 = vdwg.mxu0
  %329 = vmatpush.bf16.msra.mxu0 %v257
  %330 = vmatpush.bf16.msra.mxu0 %v256
  %331 = vmatpush.bf16.msra.mxu0 %v255
  %332 = vmatpush.bf16.msra.mxu0 %v254
  %333 = vmatpush.bf16.msra.mxu0 %v253
  %334 = vmatpush.bf16.msra.mxu0 %v252
  %335 = vmatpush.bf16.msra.mxu0 %v251
  %336 = vmatpush.bf16.msra.mxu0 %v250
  %337 = vmatmul.bf16.gmra.mxu0 %v93
  %v338 = vpop.f32.mrf.mxu0
  %v339 = vadd.f32 %v326, %v338
  %v340 = vpop.f32.mrf.mxu0
  %341 = vdwg.mxu0
  %v342 = vmax.f32 %v339, 0.0
  %v343 = vpack.c.bf16 %v342, %v342
  %vm344 = vcmask 257024
  %345 = vst.msk [vmem:[%s3] sm:$0xf] %vm344, %v343
  // Predicated region
  $region14: #{vqvae_encoder_forward.6} parent=0 // pred_check
    _
  $region15: #{vqvae_encoder_forward.6} parent=0 // pred_check_branch
    %347 = sbr.rel (0) target = $region17
  $region16: #{vqvae_encoder_forward.6} parent=0 // pred_region
    _
  $region17: #{vqvae_encoder_forward.6} parent=0 // pred_fallthru
    _
  // Predicated region
  $region18: #{vqvae_encoder_forward.6} parent=0 // pred_check
    _
  $region19: #{vqvae_encoder_forward.6} parent=0 // pred_check_branch
    %349 = sbr.rel (0) target = $region21
  $region20: #{vqvae_encoder_forward.6} parent=0 // pred_region
    _
  $region21: #{vqvae_encoder_forward.6} parent=0 // pred_fallthru
    _

// kernel: vqvae_encoder_forward.7
$region0: #{vqvae_encoder_forward.7}
  #allocation0 [shape = 'u32[]', space=smem, size = 0x4, offset = 0x4, fixed_abs, tag = 'smem constant byte address 0x4 - core index']
  #allocation1 [shape = 'u32[72,128]{1,0:T(1,128)}', space=vmem, size = 0x9000, scoped, tag = 'internal scratch']
  %s0 = inlined_call_operand.vmem [shape: bf16[8,288], index: 0, kind: input, shape index: {}]
  %s1 = inlined_call_operand.vmem [shape: bf16[288,32], index: 1, kind: input, shape index: {}]
  %s2 = inlined_call_operand.vmem [shape: f32[1,32], index: 2, kind: input, shape index: {}]
  %s3 = inlined_call_operand.vmem [shape: f32[32,512], index: 3, kind: input, shape index: {}]
  %s4 = inlined_call_operand.vmem [shape: f32[512,32], index: 4, kind: input, shape index: {}]
  %s5 = inlined_call_operand.vmem [shape: f32[1,512], index: 5, kind: input, shape index: {}]
  %s6 = inlined_call_operand.vmem [shape: s32[8,1], index: 6, kind: output, shape index: {0}]
  %s7 = inlined_call_operand.hbm [shape: f32[8,32], index: 7, kind: output, shape index: {1}]
  %8 = xla_tuple %s6, %s7
  %s9 = sld [smem:[#allocation0]]
  $region42: #{vqvae_encoder_forward.7} parent=0
    _
  %s11 = ssub.s32 1, %s9
  %s12 = scalar_select 0, %s11, %s9
  $region1: #{vqvae_encoder_forward.7} parent=0
    #allocation2 [shape = 'u8[4096]{0}', space=vmem, size = 0x1000, scoped, tag = 'output window, operand 1, single buffered']
    #allocation3 [shape = 's32[1]{0}', space=sflag, size = 0x4, scoped, tag = 'scoped memory for vqvae_encoder_forward.7']
    %13 = vsyncpa [#allocation3], 0
    // Predicated region
    $region2: #{vqvae_encoder_forward.7} parent=1 // pred_check
      _
    $region3: #{vqvae_encoder_forward.7} parent=1 // pred_check_branch
      %15 = sbr.rel (0) target = $region5
    $region4: #{vqvae_encoder_forward.7} parent=1 // pred_region
      _
    $region5: #{vqvae_encoder_forward.7} parent=1 // pred_fallthru
      _
    // Predicated region
    $region6: #{vqvae_encoder_forward.7} parent=1 // pred_check
      _
    $region7: #{vqvae_encoder_forward.7} parent=1 // pred_check_branch
      %17 = sbr.rel (0) target = $region9
    $region8: #{vqvae_encoder_forward.7} parent=1 // pred_region
      _
    $region9: #{vqvae_encoder_forward.7} parent=1 // pred_fallthru
      _
    // Predicated region
    $region10: #{vqvae_encoder_forward.7} parent=1 // pred_check
      _
    $region11: #{vqvae_encoder_forward.7} parent=1 // pred_check_branch
      %19 = sbr.rel (0) target = $region13
    $region12: #{vqvae_encoder_forward.7} parent=1 // pred_region
      _
    $region13: #{vqvae_encoder_forward.7} parent=1 // pred_fallthru
      _
    // Predicated region
    $region14: #{vqvae_encoder_forward.7} parent=1 // pred_check
      _
    $region15: #{vqvae_encoder_forward.7} parent=1 // pred_check_branch
      %21 = sbr.rel (0) target = $region17
    $region16: #{vqvae_encoder_forward.7} parent=1 // pred_region
      _
    $region17: #{vqvae_encoder_forward.7} parent=1 // pred_fallthru
      _
    // Predicated region
    $region18: #{vqvae_encoder_forward.7} parent=1 // pred_check
      _
    $region19: #{vqvae_encoder_forward.7} parent=1 // pred_check_branch
      %23 = sbr.rel (0) target = $region21
    $region20: #{vqvae_encoder_forward.7} parent=1 // pred_region
      _
    $region21: #{vqvae_encoder_forward.7} parent=1 // pred_fallthru
      _
    // Predicated region
    $region22: #{vqvae_encoder_forward.7} parent=1 // pred_check
      _
    $region23: #{vqvae_encoder_forward.7} parent=1 // pred_check_branch
      %25 = sbr.rel (0) target = $region25
    $region24: #{vqvae_encoder_forward.7} parent=1 // pred_region
      _
    $region25: #{vqvae_encoder_forward.7} parent=1 // pred_fallthru
      _
    %v27 = vld [vmem:[%s0] sm:$0xff]
    %v28 = vld [vmem:[%s0 + $0x8] sm:$0xf]
    %v29 = vld [vmem:[%s1] sm:$0xf]
    %v30 = vld [vmem:[%s1 + $0x4] sm:$0xf]
    %v31 = vld [vmem:[%s1 + $0x8] sm:$0xf]
    %v32 = vld [vmem:[%s1 + $0xc] sm:$0xf]
    %v33 = vld [vmem:[%s1 + $0x10] sm:$0xf]
    %v34 = vld [vmem:[%s1 + $0x14] sm:$0xf]
    %v35 = vld [vmem:[%s1 + $0x18] sm:$0xf]
    %v36 = vld [vmem:[%s1 + $0x1c] sm:$0xf]
    %v37 = vld [vmem:[%s1 + $0x20] sm:$0xf]
    %v38 = vld [vmem:[%s1 + $0x24] sm:$0xf]
    %v39 = vld [vmem:[%s1 + $0x28] sm:$0xf]
    %v40 = vld [vmem:[%s1 + $0x2c] sm:$0xf]
    %v41 = vld [vmem:[%s1 + $0x30] sm:$0xf]
    %v42 = vld [vmem:[%s1 + $0x34] sm:$0xf]
    %v43 = vld [vmem:[%s1 + $0x38] sm:$0xf]
    %v44 = vld [vmem:[%s1 + $0x3c] sm:$0xf]
    %v45 = vld [vmem:[%s1 + $0x40] sm:$0xf]
    %v46 = vld [vmem:[%s1 + $0x44] sm:$0xf]
    %v47 = vld [vmem:[%s1 + $0x48] sm:$0xf]
    %v48 = vld [vmem:[%s1 + $0x4c] sm:$0xf]
    %v49 = vld [vmem:[%s1 + $0x50] sm:$0xf]
    %v50 = vld [vmem:[%s1 + $0x54] sm:$0xf]
    %v51 = vld [vmem:[%s1 + $0x58] sm:$0xf]
    %v52 = vld [vmem:[%s1 + $0x5c] sm:$0xf]
    %v53 = vld [vmem:[%s1 + $0x60] sm:$0xf]
    %v54 = vld [vmem:[%s1 + $0x64] sm:$0xf]
    %v55 = vld [vmem:[%s1 + $0x68] sm:$0xf]
    %v56 = vld [vmem:[%s1 + $0x6c] sm:$0xf]
    %v57 = vld [vmem:[%s1 + $0x70] sm:$0xf]
    %v58 = vld [vmem:[%s1 + $0x74] sm:$0xf]
    %v59 = vld [vmem:[%s1 + $0x78] sm:$0xf]
    %v60 = vld [vmem:[%s1 + $0x7c] sm:$0xf]
    %v61 = vld [vmem:[%s1 + $0x80] sm:$0xf]
    %v62 = vld [vmem:[%s1 + $0x84] sm:$0xf]
    %v63 = vld [vmem:[%s1 + $0x88] sm:$0xf]
    %v64 = vld [vmem:[%s1 + $0x8c] sm:$0xf]
    %v65 = vld [vmem:[%s2] sm:$0x1]
    %v67 = vperm.slane %v65, 0
    %v71 = vunpack.c.l.b16 %v27
    %v72 = vunpack.c.h.b16 %v27
    %v73 = vunpack.c.l.b16 %v28
    %v74 = vpack.c.b16 %v71, %v71
    %v75 = vpack.c.b16 %v72, %v72
    %v76 = vpack.c.b16 %v73, %v73
    %v115 = vunpack.c.l.b16 %v29
    %v116 = vunpack.c.l.b16 %v30
    %v117 = vunpack.c.l.b16 %v31
    %v118 = vunpack.c.l.b16 %v32
    %v119 = vunpack.c.l.b16 %v33
    %v120 = vunpack.c.l.b16 %v34
    %v121 = vunpack.c.l.b16 %v35
    %v122 = vunpack.c.l.b16 %v36
    %v123 = vunpack.c.l.b16 %v37
    %v124 = vunpack.c.l.b16 %v38
    %v125 = vunpack.c.l.b16 %v39
    %v126 = vunpack.c.l.b16 %v40
    %v127 = vunpack.c.l.b16 %v41
    %v128 = vunpack.c.l.b16 %v42
    %v129 = vunpack.c.l.b16 %v43
    %v130 = vunpack.c.l.b16 %v44
    %v131 = vunpack.c.l.b16 %v45
    %v132 = vunpack.c.l.b16 %v46
    %v133 = vunpack.c.l.b16 %v47
    %v134 = vunpack.c.l.b16 %v48
    %v135 = vunpack.c.l.b16 %v49
    %v136 = vunpack.c.l.b16 %v50
    %v137 = vunpack.c.l.b16 %v51
    %v138 = vunpack.c.l.b16 %v52
    %v139 = vunpack.c.l.b16 %v53
    %v140 = vunpack.c.l.b16 %v54
    %v141 = vunpack.c.l.b16 %v55
    %v142 = vunpack.c.l.b16 %v56
    %v143 = vunpack.c.l.b16 %v57
    %v144 = vunpack.c.l.b16 %v58
    %v145 = vunpack.c.l.b16 %v59
    %v146 = vunpack.c.l.b16 %v60
    %v147 = vunpack.c.l.b16 %v61
    %v148 = vunpack.c.l.b16 %v62
    %v149 = vunpack.c.l.b16 %v63
    %v150 = vunpack.c.l.b16 %v64
    %v151 = vpack.c.b16 %v116, %v115
    %v152 = vpack.c.b16 %v118, %v117
    %v153 = vpack.c.b16 %v120, %v119
    %v154 = vpack.c.b16 %v122, %v121
    %v155 = vpack.c.b16 %v124, %v123
    %v156 = vpack.c.b16 %v126, %v125
    %v157 = vpack.c.b16 %v128, %v127
    %v158 = vpack.c.b16 %v130, %v129
    %v159 = vpack.c.b16 %v132, %v131
    %v160 = vpack.c.b16 %v134, %v133
    %v161 = vpack.c.b16 %v136, %v135
    %v162 = vpack.c.b16 %v138, %v137
    %v163 = vpack.c.b16 %v140, %v139
    %v164 = vpack.c.b16 %v142, %v141
    %v165 = vpack.c.b16 %v144, %v143
    %v166 = vpack.c.b16 %v146, %v145
    %v167 = vpack.c.b16 %v148, %v147
    %v168 = vpack.c.b16 %v150, %v149
    %vm187 = vcmask 261120
    %v189 = vsel %vm187, %v76, 0
    %191 = vmatpush.bf16.msra.mxu0 %v158
    %192 = vmatpush.bf16.msra.mxu0 %v157
    %193 = vmatpush.bf16.msra.mxu0 %v156
    %194 = vmatpush.bf16.msra.mxu0 %v155
    %195 = vmatpush.bf16.msra.mxu0 %v154
    %196 = vmatpush.bf16.msra.mxu0 %v153
    %197 = vmatpush.bf16.msra.mxu0 %v152
    %198 = vmatpush.bf16.msra.mxu0 %v151
    %199 = vmatmul.bf16.gmra.mxu0 %v74
    %v200 = vpop.f32.mrf.mxu0
    %v201 = vadd.f32 %v67, %v200
    %v202 = vpop.f32.mrf.mxu0
    %203 = vdwg.mxu0
    %204 = vmatpush.bf16.msra.mxu0 %v166
    %205 = vmatpush.bf16.msra.mxu0 %v165
    %206 = vmatpush.bf16.msra.mxu0 %v164
    %207 = vmatpush.bf16.msra.mxu0 %v163
    %208 = vmatpush.bf16.msra.mxu0 %v162
    %209 = vmatpush.bf16.msra.mxu0 %v161
    %210 = vmatpush.bf16.msra.mxu0 %v160
    %211 = vmatpush.bf16.msra.mxu0 %v159
    %212 = vmatmul.bf16.gmra.mxu0 %v75
    %v213 = vpop.f32.mrf.mxu0
    %v214 = vadd.f32 %v201, %v213
    %v215 = vpop.f32.mrf.mxu0
    %216 = vdwg.mxu0
    %217 = vmatpush.bf16.msra.mxu0 0
    %218 = vmatpush.bf16.msra.mxu0 0
    %219 = vmatpush.bf16.msra.mxu0 0
    %220 = vmatpush.bf16.msra.mxu0 0
    %221 = vmatpush.bf16.msra.mxu0 0
    %222 = vmatpush.bf16.msra.mxu0 0
    %223 = vmatpush.bf16.msra.mxu0 %v168
    %224 = vmatpush.bf16.msra.mxu0 %v167
    %225 = vmatmul.bf16.gmra.mxu0 %v189
    %v226 = vpop.f32.mrf.mxu0
    %v227 = vadd.f32 %v214, %v226
    %v228 = vpop.f32.mrf.mxu0
    %229 = vdwg.mxu0
    %v230 = vld [vmem:[%s3] sm:$0xff]
    %v231 = vld [vmem:[%s3 + $0x8] sm:$0xff]
    %v232 = vld [vmem:[%s3 + $0x10] sm:$0xff]
    %v233 = vld [vmem:[%s3 + $0x18] sm:$0xff]
    %v234 = vld [vmem:[%s3 + $0x20] sm:$0xff]
    %v235 = vld [vmem:[%s3 + $0x28] sm:$0xff]
    %v236 = vld [vmem:[%s3 + $0x30] sm:$0xff]
    %v237 = vld [vmem:[%s3 + $0x38] sm:$0xff]
    %v238 = vld [vmem:[%s3 + $0x40] sm:$0xff]
    %v239 = vld [vmem:[%s3 + $0x48] sm:$0xff]
    %v240 = vld [vmem:[%s3 + $0x50] sm:$0xff]
    %v241 = vld [vmem:[%s3 + $0x58] sm:$0xff]
    %v242 = vld [vmem:[%s3 + $0x60] sm:$0xff]
    %v243 = vld [vmem:[%s3 + $0x68] sm:$0xff]
    %v244 = vld [vmem:[%s3 + $0x70] sm:$0xff]
    %v245 = vld [vmem:[%s3 + $0x78] sm:$0xff]
    %v247 = vsel %vm187, %v227, 0
    %249 = vmatpush.msra.mxu0 0.0
    %250 = vmatpush.msra.mxu0 0.0
    %251 = vmatpush.msra.mxu0 0.0
    %252 = vmatpush.msra.mxu0 0.0
    %253 = vmatpush.msra.mxu0 0.0
    %254 = vmatpush.msra.mxu0 0.0
    %255 = vmatpush.msra.mxu0 0.0
    %256 = vmatpush.msra.mxu0 0.0
    %257 = vmatpush.msra.mxu0 0.0
    %258 = vmatpush.msra.mxu0 0.0
    %259 = vmatpush.msra.mxu0 0.0
    %260 = vmatpush.msra.mxu0 0.0
    %261 = vmatpush.msra.mxu0 %v242
    %262 = vmatpush.msra.mxu0 %v238
    %263 = vmatpush.msra.mxu0 %v234
    %264 = vmatpush.msra.mxu0 %v230
    %265 = vmatmul.f32.gmra.mxu0 %v247
    %v266 = vpop.f32.mrf.mxu0
    %v267 = vadd.f32 0.0, %v266
    %268 = vdwg.mxu0
    %269 = vmatpush.msra.mxu0 0.0
    %270 = vmatpush.msra.mxu0 0.0
    %271 = vmatpush.msra.mxu0 0.0
    %272 = vmatpush.msra.mxu0 0.0
    %273 = vmatpush.msra.mxu0 0.0
    %274 = vmatpush.msra.mxu0 0.0
    %275 = vmatpush.msra.mxu0 0.0
    %276 = vmatpush.msra.mxu0 0.0
    %277 = vmatpush.msra.mxu0 0.0
    %278 = vmatpush.msra.mxu0 0.0
    %279 = vmatpush.msra.mxu0 0.0
    %280 = vmatpush.msra.mxu0 0.0
    %281 = vmatpush.msra.mxu0 %v243
    %282 = vmatpush.msra.mxu0 %v239
    %283 = vmatpush.msra.mxu0 %v235
    %284 = vmatpush.msra.mxu0 %v231
    %285 = vmatmul.f32.gmra.mxu0 %v247
    %v286 = vpop.f32.mrf.mxu0
    %v287 = vadd.f32 0.0, %v286
    %288 = vdwg.mxu0
    %289 = vmatpush.msra.mxu0 0.0
    %290 = vmatpush.msra.mxu0 0.0
    %291 = vmatpush.msra.mxu0 0.0
    %292 = vmatpush.msra.mxu0 0.0
    %293 = vmatpush.msra.mxu0 0.0
    %294 = vmatpush.msra.mxu0 0.0
    %295 = vmatpush.msra.mxu0 0.0
    %296 = vmatpush.msra.mxu0 0.0
    %297 = vmatpush.msra.mxu0 0.0
    %298 = vmatpush.msra.mxu0 0.0
    %299 = vmatpush.msra.mxu0 0.0
    %300 = vmatpush.msra.mxu0 0.0
    %301 = vmatpush.msra.mxu0 %v244
    %302 = vmatpush.msra.mxu0 %v240
    %303 = vmatpush.msra.mxu0 %v236
    %304 = vmatpush.msra.mxu0 %v232
    %305 = vmatmul.f32.gmra.mxu0 %v247
    %v306 = vpop.f32.mrf.mxu0
    %v307 = vadd.f32 0.0, %v306
    %308 = vdwg.mxu0
    %309 = vmatpush.msra.mxu0 0.0
    %310 = vmatpush.msra.mxu0 0.0
    %311 = vmatpush.msra.mxu0 0.0
    %312 = vmatpush.msra.mxu0 0.0
    %313 = vmatpush.msra.mxu0 0.0
    %314 = vmatpush.msra.mxu0 0.0
    %315 = vmatpush.msra.mxu0 0.0
    %316 = vmatpush.msra.mxu0 0.0
    %317 = vmatpush.msra.mxu0 0.0
    %318 = vmatpush.msra.mxu0 0.0
    %319 = vmatpush.msra.mxu0 0.0
    %320 = vmatpush.msra.mxu0 0.0
    %321 = vmatpush.msra.mxu0 %v245
    %322 = vmatpush.msra.mxu0 %v241
    %323 = vmatpush.msra.mxu0 %v237
    %324 = vmatpush.msra.mxu0 %v233
    %325 = vmatmul.f32.gmra.mxu0 %v247
    %v326 = vpop.f32.mrf.mxu0
    %v327 = vadd.f32 0.0, %v326
    %328 = vdwg.mxu0
    %v329 = vld [vmem:[%s5] sm:$0xf]
    %v330 = vmul.f32 %v267, 2.0
    %v331 = vmul.f32 %v287, 2.0
    %v332 = vmul.f32 %v307, 2.0
    %v333 = vmul.f32 %v327, 2.0
    %v335 = vperm.slane %v329, 0
    %v336 = vperm.slane %v329, 1
    %v337 = vperm.slane %v329, 2
    %v338 = vperm.slane %v329, 3
    %v343 = vsub.f32 %v335, %v330
    %v344 = vsub.f32 %v336, %v331
    %v345 = vsub.f32 %v337, %v332
    %v346 = vsub.f32 %v338, %v333
    %v347 = vmin.f32 %v343, %v344
    %v348 = vmin.f32 %v345, %v346
    %v349 = vmin.f32 %v347, %v348
    %350 = vmin.xlane.f32.xlu0 %v349
    %v351 = vpop.xlane.xlu0 %350
    %v352 = vlaneseq
    %v353 = vand.u32 %v352, 127
    %v354 = vadd.s32 %v353, 128
    %v355 = vadd.s32 %v353, 256
    %v356 = vadd.s32 %v353, 384
    %vm357 = vcmp.eq.f32.partialorder %v343, %v351
    %vm358 = vcmp.eq.f32.partialorder %v344, %v351
    %vm359 = vcmp.eq.f32.partialorder %v345, %v351
    %vm360 = vcmp.eq.f32.partialorder %v346, %v351
    %v361 = vsel %vm357, %v353, 512
    %v362 = vsel %vm358, %v354, 512
    %v363 = vsel %vm359, %v355, 512
    %v364 = vsel %vm360, %v356, 512
    %vm365 = vcmp.lt.s32.totalorder %v361, %v362
    %v366 = vsel %vm365, %v361, %v362
    %vm367 = vcmp.lt.s32.totalorder %v363, %v364
    %v368 = vsel %vm367, %v363, %v364
    %vm369 = vcmp.lt.s32.totalorder %v366, %v368
    %v370 = vsel %vm369, %v366, %v368
    %v371 = vand.u32 %v370, 65535
    %v372 = vshra.s32 %v370, 16
    %v373 = vcvt.s32.f32 %v371
    %v374 = vcvt.s32.f32 %v372
    %375 = vmin.xlane.f32.xlu0 %v374
    %v376 = vpop.xlane.xlu0 %375
    %vm377 = vcmp.eq.f32.partialorder %v374, %v376
    %v378 = vsel %vm377, %v373, inf
    %379 = vmin.xlane.f32.xlu0 %v378
    %v380 = vpop.xlane.xlu0 %379
    %v381 = vcvt.f32.s32 %v380
    %v382 = vcvt.f32.s32 %v376
    %v383 = vshll.u32 %v382, 16
    %v384 = vadd.s32 %v383, %v381
    %vm385 = vcmask 7168
    %386 = vst.msk [vmem:[%s6] sm:$0xff] %vm385, %v384
    %vm387 = vcmp.eq.s32.totalorder %v353, %v384
    %vm388 = vcmp.eq.s32.totalorder %v354, %v384
    %vm389 = vcmp.eq.s32.totalorder %v355, %v384
    %vm390 = vcmp.eq.s32.totalorder %v356, %v384
    %v391 = vsel %vm387, 1, 0
    %v392 = vsel %vm388, 1, 0
    %v393 = vsel %vm389, 1, 0
    %v394 = vsel %vm390, 1, 0
    %v395 = vcvt.s32.f32 %v391
    %v396 = vcvt.s32.f32 %v392
    %v397 = vcvt.s32.f32 %v393
    %v398 = vcvt.s32.f32 %v394
    %v399 = vld [vmem:[%s4] sm:$0xff]
    %v400 = vld [vmem:[%s4 + $0x8] sm:$0xff]
    %v401 = vld [vmem:[%s4 + $0x10] sm:$0xff]
    %v402 = vld [vmem:[%s4 + $0x18] sm:$0xff]
    %v403 = vld [vmem:[%s4 + $0x20] sm:$0xff]
    %v404 = vld [vmem:[%s4 + $0x28] sm:$0xff]
    %v405 = vld [vmem:[%s4 + $0x30] sm:$0xff]
    %v406 = vld [vmem:[%s4 + $0x38] sm:$0xff]
    %v407 = vld [vmem:[%s4 + $0x40] sm:$0xff]
    %v408 = vld [vmem:[%s4 + $0x48] sm:$0xff]
    %v409 = vld [vmem:[%s4 + $0x50] sm:$0xff]
    %v410 = vld [vmem:[%s4 + $0x58] sm:$0xff]
    %v411 = vld [vmem:[%s4 + $0x60] sm:$0xff]
    %v412 = vld [vmem:[%s4 + $0x68] sm:$0xff]
    %v413 = vld [vmem:[%s4 + $0x70] sm:$0xff]
    %v414 = vld [vmem:[%s4 + $0x78] sm:$0xff]
    %v415 = vld [vmem:[%s4 + $0x80] sm:$0xff]
    %v416 = vld [vmem:[%s4 + $0x88] sm:$0xff]
    %v417 = vld [vmem:[%s4 + $0x90] sm:$0xff]
    %v418 = vld [vmem:[%s4 + $0x98] sm:$0xff]
    %v419 = vld [vmem:[%s4 + $0xa0] sm:$0xff]
    %v420 = vld [vmem:[%s4 + $0xa8] sm:$0xff]
    %v421 = vld [vmem:[%s4 + $0xb0] sm:$0xff]
    %v422 = vld [vmem:[%s4 + $0xb8] sm:$0xff]
    %v423 = vld [vmem:[%s4 + $0xc0] sm:$0xff]
    %v424 = vld [vmem:[%s4 + $0xc8] sm:$0xff]
    %v425 = vld [vmem:[%s4 + $0xd0] sm:$0xff]
    %v426 = vld [vmem:[%s4 + $0xd8] sm:$0xff]
    %v427 = vld [vmem:[%s4 + $0xe0] sm:$0xff]
    %v428 = vld [vmem:[%s4 + $0xe8] sm:$0xff]
    %v429 = vld [vmem:[%s4 + $0xf0] sm:$0xff]
    %v430 = vld [vmem:[%s4 + $0xf8] sm:$0xff]
    %v431 = vld [vmem:[%s4 + $0x100] sm:$0xff]
    %v432 = vld [vmem:[%s4 + $0x108] sm:$0xff]
    %v433 = vld [vmem:[%s4 + $0x110] sm:$0xff]
    %v434 = vld [vmem:[%s4 + $0x118] sm:$0xff]
    %v435 = vld [vmem:[%s4 + $0x120] sm:$0xff]
    %v436 = vld [vmem:[%s4 + $0x128] sm:$0xff]
    %v437 = vld [vmem:[%s4 + $0x130] sm:$0xff]
    %v438 = vld [vmem:[%s4 + $0x138] sm:$0xff]
    %v439 = vld [vmem:[%s4 + $0x140] sm:$0xff]
    %v440 = vld [vmem:[%s4 + $0x148] sm:$0xff]
    %v441 = vld [vmem:[%s4 + $0x150] sm:$0xff]
    %v442 = vld [vmem:[%s4 + $0x158] sm:$0xff]
    %v443 = vld [vmem:[%s4 + $0x160] sm:$0xff]
    %v444 = vld [vmem:[%s4 + $0x168] sm:$0xff]
    %v445 = vld [vmem:[%s4 + $0x170] sm:$0xff]
    %v446 = vld [vmem:[%s4 + $0x178] sm:$0xff]
    %v447 = vld [vmem:[%s4 + $0x180] sm:$0xff]
    %v448 = vld [vmem:[%s4 + $0x188] sm:$0xff]
    %v449 = vld [vmem:[%s4 + $0x190] sm:$0xff]
    %v450 = vld [vmem:[%s4 + $0x198] sm:$0xff]
    %v451 = vld [vmem:[%s4 + $0x1a0] sm:$0xff]
    %v452 = vld [vmem:[%s4 + $0x1a8] sm:$0xff]
    %v453 = vld [vmem:[%s4 + $0x1b0] sm:$0xff]
    %v454 = vld [vmem:[%s4 + $0x1b8] sm:$0xff]
    %v455 = vld [vmem:[%s4 + $0x1c0] sm:$0xff]
    %v456 = vld [vmem:[%s4 + $0x1c8] sm:$0xff]
    %v457 = vld [vmem:[%s4 + $0x1d0] sm:$0xff]
    %v458 = vld [vmem:[%s4 + $0x1d8] sm:$0xff]
    %v459 = vld [vmem:[%s4 + $0x1e0] sm:$0xff]
    %v460 = vld [vmem:[%s4 + $0x1e8] sm:$0xff]
    %v461 = vld [vmem:[%s4 + $0x1f0] sm:$0xff]
    %v462 = vld [vmem:[%s4 + $0x1f8] sm:$0xff]
    %463 = vmatpush.msra.mxu0 %v414
    %464 = vmatpush.msra.mxu0 %v413
    %465 = vmatpush.msra.mxu0 %v412
    %466 = vmatpush.msra.mxu0 %v411
    %467 = vmatpush.msra.mxu0 %v410
    %468 = vmatpush.msra.mxu0 %v409
    %469 = vmatpush.msra.mxu0 %v408
    %470 = vmatpush.msra.mxu0 %v407
    %471 = vmatpush.msra.mxu0 %v406
    %472 = vmatpush.msra.mxu0 %v405
    %473 = vmatpush.msra.mxu0 %v404
    %474 = vmatpush.msra.mxu0 %v403
    %475 = vmatpush.msra.mxu0 %v402
    %476 = vmatpush.msra.mxu0 %v401
    %477 = vmatpush.msra.mxu0 %v400
    %478 = vmatpush.msra.mxu0 %v399
    %479 = vmatmul.f32.gmra.mxu0 %v395
    %v480 = vpop.f32.mrf.mxu0
    %v481 = vadd.f32 0.0, %v480
    %482 = vdwg.mxu0
    %483 = vmatpush.msra.mxu0 %v430
    %484 = vmatpush.msra.mxu0 %v429
    %485 = vmatpush.msra.mxu0 %v428
    %486 = vmatpush.msra.mxu0 %v427
    %487 = vmatpush.msra.mxu0 %v426
    %488 = vmatpush.msra.mxu0 %v425
    %489 = vmatpush.msra.mxu0 %v424
    %490 = vmatpush.msra.mxu0 %v423
    %491 = vmatpush.msra.mxu0 %v422
    %492 = vmatpush.msra.mxu0 %v421
    %493 = vmatpush.msra.mxu0 %v420
    %494 = vmatpush.msra.mxu0 %v419
    %495 = vmatpush.msra.mxu0 %v418
    %496 = vmatpush.msra.mxu0 %v417
    %497 = vmatpush.msra.mxu0 %v416
    %498 = vmatpush.msra.mxu0 %v415
    %499 = vmatmul.f32.gmra.mxu0 %v396
    %v500 = vpop.f32.mrf.mxu0
    %v501 = vadd.f32 %v481, %v500
    %502 = vdwg.mxu0
    %503 = vmatpush.msra.mxu0 %v446
    %504 = vmatpush.msra.mxu0 %v445
    %505 = vmatpush.msra.mxu0 %v444
    %506 = vmatpush.msra.mxu0 %v443
    %507 = vmatpush.msra.mxu0 %v442
    %508 = vmatpush.msra.mxu0 %v441
    %509 = vmatpush.msra.mxu0 %v440
    %510 = vmatpush.msra.mxu0 %v439
    %511 = vmatpush.msra.mxu0 %v438
    %512 = vmatpush.msra.mxu0 %v437
    %513 = vmatpush.msra.mxu0 %v436
    %514 = vmatpush.msra.mxu0 %v435
    %515 = vmatpush.msra.mxu0 %v434
    %516 = vmatpush.msra.mxu0 %v433
    %517 = vmatpush.msra.mxu0 %v432
    %518 = vmatpush.msra.mxu0 %v431
    %519 = vmatmul.f32.gmra.mxu0 %v397
    %v520 = vpop.f32.mrf.mxu0
    %v521 = vadd.f32 %v501, %v520
    %522 = vdwg.mxu0
    %523 = vmatpush.msra.mxu0 %v462
    %524 = vmatpush.msra.mxu0 %v461
    %525 = vmatpush.msra.mxu0 %v460
    %526 = vmatpush.msra.mxu0 %v459
    %527 = vmatpush.msra.mxu0 %v458
    %528 = vmatpush.msra.mxu0 %v457
    %529 = vmatpush.msra.mxu0 %v456
    %530 = vmatpush.msra.mxu0 %v455
    %531 = vmatpush.msra.mxu0 %v454
    %532 = vmatpush.msra.mxu0 %v453
    %533 = vmatpush.msra.mxu0 %v452
    %534 = vmatpush.msra.mxu0 %v451
    %535 = vmatpush.msra.mxu0 %v450
    %536 = vmatpush.msra.mxu0 %v449
    %537 = vmatpush.msra.mxu0 %v448
    %538 = vmatpush.msra.mxu0 %v447
    %539 = vmatmul.f32.gmra.mxu0 %v398
    %v540 = vpop.f32.mrf.mxu0
    %v541 = vadd.f32 %v521, %v540
    %542 = vdwg.mxu0
    %543 = vst.msk [vmem:[#allocation2] sm:$0xff] %vm187, %v541
    // Predicated region
    $region26: #{vqvae_encoder_forward.7} parent=1 // pred_check
      _
    $region27: #{vqvae_encoder_forward.7} parent=1 // pred_check_branch
      %545 = sbr.rel (0) target = $region29
    $region28: #{vqvae_encoder_forward.7} parent=1 // pred_region
      _
    $region29: #{vqvae_encoder_forward.7} parent=1 // pred_fallthru
      _
    // Predicated region
    $region30: #{vqvae_encoder_forward.7} parent=1 // pred_check
      _
    $region31: #{vqvae_encoder_forward.7} parent=1 // pred_check_branch
      %547 = sbr.rel (0) target = $region33
    $region32: #{vqvae_encoder_forward.7} parent=1 // pred_region
      %549 = vsyncadd [#allocation3], 0
      %s551 = sshll.u32 [#allocation2], 4
      %s552 = int_to_ptr.vmem [resolvable:$true] %s551
      %s553 = sshll.u32 %s7, 4
      %s554 = int_to_ptr.hbm [resolvable:$true] %s553
      %556 = dma.vmem_to_hbm [thread:$0]  %s552, 128, %s554, [#allocation3]
    $region33: #{vqvae_encoder_forward.7} parent=1 // pred_fallthru
      _
    // Predicated region
    $region34: #{vqvae_encoder_forward.7} parent=1 // pred_check
      _
    $region35: #{vqvae_encoder_forward.7} parent=1 // pred_check_branch
      %558 = sbr.rel (0) target = $region37
    $region36: #{vqvae_encoder_forward.7} parent=1 // pred_region
      _
    $region37: #{vqvae_encoder_forward.7} parent=1 // pred_fallthru
      _
    // Predicated region
    $region38: #{vqvae_encoder_forward.7} parent=1 // pred_check
      _
    $region39: #{vqvae_encoder_forward.7} parent=1 // pred_check_branch
      %560 = sbr.rel (0) target = $region41
    $region40: #{vqvae_encoder_forward.7} parent=1 // pred_region
      %562 = dma.done [#allocation3], 128
    $region41: #{vqvae_encoder_forward.7} parent=1 // pred_fallthru
      _
    %563 = vsyncpa [#allocation3], 1

</llo_original>
